<compile_context>
chip_gen: v7x
topology: tpu7x:2x2x1
jax: 0.10.0
libtpu: 0.0.40
codegen_flags: <defaults>
</compile_context>

<pallas_src>
import jax
import jax.numpy as jnp
from jax.experimental import pallas as pl
from jax.experimental.pallas import tpu as pltpu


# ----------------------------- helpers --------------------------------------

def _row_tile(m, max_tile=512):
    """Row-tile size: the full (possibly unaligned) dim if small, else a
    multiple-of-8 tile; partial edge blocks are handled by Pallas masking."""
    return m if m <= max_tile else max_tile


_PAR1D = pltpu.CompilerParams(dimension_semantics=("parallel",))


# ------------------------ matmul + bias + ReLU kernel ------------------------

def _matmul_bias_relu_kernel(x_ref, w_ref, b_ref, o_ref):
    # x: (tm, K) bf16, w: (K, N) bf16, b: (1, N) f32 -> o: (tm, N) f32
    acc = jnp.dot(x_ref[...], w_ref[...], preferred_element_type=jnp.float32)
    o_ref[...] = jnp.maximum(acc + b_ref[...], 0.0)


def pallas_matmul_bias_relu(x_bf16, w_bf16, b_row_f32):
    M, K = x_bf16.shape
    _, N = w_bf16.shape
    tm = _row_tile(M)
    return pl.pallas_call(
        _matmul_bias_relu_kernel,
        out_shape=jax.ShapeDtypeStruct((M, N), jnp.float32),
        grid=(pl.cdiv(M, tm),),
        in_specs=[
            pl.BlockSpec((tm, K), lambda i: (i, 0)),   # M-tiled activations
            pl.BlockSpec((K, N), lambda i: (0, 0)),    # weight: VMEM resident
            pl.BlockSpec((1, N), lambda i: (0, 0)),    # bias: VMEM resident
        ],
        out_specs=pl.BlockSpec((tm, N), lambda i: (i, 0)),
        compiler_params=_PAR1D,
    )(x_bf16, w_bf16, b_row_f32)


# ------------------------------ conv stage -----------------------------------

def conv_relu_stage(x_nhwc, w_mat_bf16, b_row_f32, kh, kw):
    """Valid, stride-1 conv + bias + ReLU via bf16 im2col + tiled Pallas matmul.

    x: (N,H,W,Cin) NHWC f32, w_mat: (kh*kw*Cin, Cout) bf16 (K ordered ki,kj,ci),
    b: (1, Cout) f32.  Returns (N, Ho, Wo, Cout) f32.
    """
    N, H, W, Cin = x_nhwc.shape
    Ho, Wo = H - kh + 1, W - kw + 1
    x16 = x_nhwc.astype(jnp.bfloat16)
    cols = [x16[:, ki:ki + Ho, kj:kj + Wo, :]
            for ki in range(kh) for kj in range(kw)]
    patches = jnp.concatenate(cols, axis=-1).reshape(N * Ho * Wo, kh * kw * Cin)
    y = pallas_matmul_bias_relu(patches, w_mat_bf16, b_row_f32)
    return y.reshape(N, Ho, Wo, -1)


# ------------------------------ max-pool kernel -------------------------------

def _max4_kernel(a_ref, b_ref, c_ref, d_ref, o_ref):
    o_ref[...] = jnp.maximum(jnp.maximum(a_ref[...], b_ref[...]),
                             jnp.maximum(c_ref[...], d_ref[...]))


def pallas_maxpool2x2(y_nhwc):
    """MaxPool2d(2,2) on NHWC via 4 quadrant views in a lane-merged layout."""
    N, H, W, C = y_nhwc.shape
    Ho, Wo = H // 2, W // 2
    R, L = N * Ho, Wo * C
    views = [y_nhwc[:, di::2, dj::2, :].reshape(R, L)
             for di in (0, 1) for dj in (0, 1)]
    tr = _row_tile(R)
    out = pl.pallas_call(
        _max4_kernel,
        out_shape=jax.ShapeDtypeStruct((R, L), jnp.float32),
        grid=(pl.cdiv(R, tr),),
        in_specs=[pl.BlockSpec((tr, L), lambda i: (i, 0))] * 4,
        out_specs=pl.BlockSpec((tr, L), lambda i: (i, 0)),
        compiler_params=_PAR1D,
    )(*views)
    return out.reshape(N, Ho, Wo, C)


# ------------------- fused pool + flatten + fc1/fc2/fc3 kernel ----------------

def _pool_fc_stack_kernel(a_ref, b_ref, c_ref, d_ref,
                          w1_ref, b1_ref, w2_ref, b2_ref, w3_ref, b3_ref,
                          o_ref):
    # 2x2 max-pool (4-way elementwise max of pre-flattened quadrant views),
    # then three back-to-back MXU matmuls with f32 bias/ReLU epilogues.
    x = jnp.maximum(jnp.maximum(a_ref[...], b_ref[...]),
                    jnp.maximum(c_ref[...], d_ref[...]))
    h = jnp.dot(x.astype(jnp.bfloat16), w1_ref[...],
                preferred_element_type=jnp.float32)
    h = jnp.maximum(h + b1_ref[...], 0.0)
    h = jnp.dot(h.astype(jnp.bfloat16), w2_ref[...],
                preferred_element_type=jnp.float32)
    h = jnp.maximum(h + b2_ref[...], 0.0)
    h = jnp.dot(h.astype(jnp.bfloat16), w3_ref[...],
                preferred_element_type=jnp.float32)
    o_ref[...] = h + b3_ref[...]


def pallas_pool_fc_stack(y_nhwc, params):
    """Fused MaxPool2d(2,2) + torch.flatten(x,1) + fc1/ReLU + fc2/ReLU + fc3."""
    N, H, W, C = y_nhwc.shape
    Ho, Wo = H // 2, W // 2
    F = C * Ho * Wo
    # Quadrant views flattened in torch (C,H,W) order so elementwise max ==
    # pool-then-flatten of the PyTorch model.
    views = [y_nhwc[:, di::2, dj::2, :].transpose(0, 3, 1, 2).reshape(N, F)
             for di in (0, 1) for dj in (0, 1)]
    w1, b1 = params["w_fc1"], params["b_fc1"]
    w2, b2 = params["w_fc2"], params["b_fc2"]
    w3, b3 = params["w_fc3"], params["b_fc3"]
    H1, H2, H3 = w1.shape[1], w2.shape[1], w3.shape[1]
    tb = _row_tile(N, 256)
    const = lambda i: (0, 0)
    return pl.pallas_call(
        _pool_fc_stack_kernel,
        out_shape=jax.ShapeDtypeStruct((N, H3), jnp.float32),
        grid=(pl.cdiv(N, tb),),
        in_specs=[pl.BlockSpec((tb, F), lambda i: (i, 0))] * 4 + [
            pl.BlockSpec((F, H1), const), pl.BlockSpec((1, H1), const),
            pl.BlockSpec((H1, H2), const), pl.BlockSpec((1, H2), const),
            pl.BlockSpec((H2, H3), const), pl.BlockSpec((1, H3), const),
        ],
        out_specs=pl.BlockSpec((tb, H3), lambda i: (i, 0)),
        compiler_params=_PAR1D,
    )(*views, w1, b1, w2, b2, w3, b3)


# --------------------------------- model --------------------------------------

def init_params(key):
    """Torch-style init, then hoist all layout transforms / bf16 casts here."""
    def uniform(k, shape, fan_in):
        bound = 1.0 / jnp.sqrt(jnp.float32(fan_in))
        return jax.random.uniform(k, shape, jnp.float32, -bound, bound)

    ks = jax.random.split(key, 10)
    w1 = uniform(ks[0], (6, 3, 5, 5), 3 * 5 * 5)       # torch OIHW
    b1 = uniform(ks[1], (6,), 3 * 5 * 5)
    w2 = uniform(ks[2], (16, 6, 5, 5), 6 * 5 * 5)
    b2 = uniform(ks[3], (16,), 6 * 5 * 5)
    wf1 = uniform(ks[4], (120, 16 * 5 * 5), 16 * 5 * 5)  # torch (out, in)
    bf1 = uniform(ks[5], (120,), 16 * 5 * 5)
    wf2 = uniform(ks[6], (84, 120), 120)
    bf2 = uniform(ks[7], (84,), 120)
    wf3 = uniform(ks[8], (11, 84), 84)
    bf3 = uniform(ks[9], (11,), 84)

    def conv_w_mat(w_oihw):
        # OIHW -> (kh*kw*Cin, Cout), K ordered (ki, kj, ci), bf16 for the MXU.
        cout = w_oihw.shape[0]
        return (jnp.transpose(w_oihw, (2, 3, 1, 0))
                .reshape(-1, cout).astype(jnp.bfloat16))

    return {
        "w_conv1": conv_w_mat(w1), "b_conv1": b1.reshape(1, -1),
        "w_conv2": conv_w_mat(w2), "b_conv2": b2.reshape(1, -1),
        "w_fc1": wf1.T.astype(jnp.bfloat16), "b_fc1": bf1.reshape(1, -1),
        "w_fc2": wf2.T.astype(jnp.bfloat16), "b_fc2": bf2.reshape(1, -1),
        "w_fc3": wf3.T.astype(jnp.bfloat16), "b_fc3": bf3.reshape(1, -1),
    }


def cnn_forward(x_nchw, params):
    x = jnp.transpose(x_nchw, (0, 2, 3, 1))                              # NHWC
    x = conv_relu_stage(x, params["w_conv1"], params["b_conv1"], 5, 5)   # (N,28,28,6)
    x = pallas_maxpool2x2(x)                                             # (N,14,14,6)
    x = conv_relu_stage(x, params["w_conv2"], params["b_conv2"], 5, 5)   # (N,10,10,16)
    return pallas_pool_fc_stack(x, params)                               # (N,11)


if __name__ == "__main__":
    key = jax.random.PRNGKey(0)
    k_x, k_p = jax.random.split(key)
    # fc1 expects 16*5*5 features, so the module requires 32x32 spatial input.
    x = jax.random.normal(k_x, (2, 3, 32, 32), jnp.float32)
    params = init_params(k_p)

    fwd = jax.jit(cnn_forward)
    out = jax.block_until_ready(fwd(x, params))
    assert out.shape == (2, 11), out.shape
    print("KERNEL_OK")
</pallas_src>

<mosaic_0001>
module attributes {stable_mosaic.version = 11 : i64} {
  func.func @_matmul_bias_relu_kernel(%arg0: i32, %arg1: memref<512x75xbf16, #tpu.memory_space<vmem>>, %arg2: memref<75x6xbf16, #tpu.memory_space<vmem>>, %arg3: memref<1x6xf32, #tpu.memory_space<vmem>>, %arg4: memref<512x6xf32, #tpu.memory_space<vmem>>) attributes {dimension_semantics = [#tpu.dimension_semantics<parallel>], iteration_bounds = array<i64: 4>, scalar_prefetch = 0 : i64, scratch_operands = 0 : i64, tpu.core_type = #tpu.core_type<tc>, window_params = [{transform_indices = @transform_0, window_bounds = array<i64: 512, 75>}, {pipeline_mode = #tpu.pipeline_mode<synchronous>, transform_indices = @transform_1, window_bounds = array<i64: 75, 6>}, {pipeline_mode = #tpu.pipeline_mode<synchronous>, transform_indices = @transform_2, window_bounds = array<i64: 1, 6>}, {transform_indices = @transform_3, window_bounds = array<i64: 512, 6>}]} {
    %c0 = arith.constant 0 : index
    %c0_0 = arith.constant 0 : index
    %0 = vector.load %arg1[%c0, %c0_0] : memref<512x75xbf16, #tpu.memory_space<vmem>>, vector<512x75xbf16>
    %c0_1 = arith.constant 0 : index
    %c0_2 = arith.constant 0 : index
    %1 = vector.load %arg2[%c0_1, %c0_2] : memref<75x6xbf16, #tpu.memory_space<vmem>>, vector<75x6xbf16>
    %cst = arith.constant dense<0.000000e+00> : vector<512x6xf32>
    %2 = tpu.matmul %0, %1, %cst {dimension_numbers = #tpu.dot_dimension_numbers<[1], [0], [0], [1], [0, 0, 1, 1], [], []>} : vector<512x75xbf16>, vector<75x6xbf16>, vector<512x6xf32> -> vector<512x6xf32>
    %c0_3 = arith.constant 0 : index
    %c0_4 = arith.constant 0 : index
    %3 = vector.load %arg3[%c0_3, %c0_4] : memref<1x6xf32, #tpu.memory_space<vmem>>, vector<1x6xf32>
    %4 = vector.broadcast %3 : vector<1x6xf32> to vector<512x6xf32>
    %5 = arith.addf %2, %4 : vector<512x6xf32>
    %cst_5 = arith.constant 0.000000e+00 : f32
    %6 = vector.broadcast %cst_5 : f32 to vector<512x6xf32>
    %7 = arith.maximumf %5, %6 : vector<512x6xf32>
    %c0_6 = arith.constant 0 : index
    %c0_7 = arith.constant 0 : index
    %8 = vector.load %arg4[%c0_6, %c0_7] : memref<512x6xf32, #tpu.memory_space<vmem>>, vector<512x6xf32>
    tpu.vector_store %arg4[%c0_6, %c0_7], %7 {strides = array<i32>} : memref<512x6xf32, #tpu.memory_space<vmem>>, vector<512x6xf32>,
    return
  }
  func.func @transform_0(%arg0: i32) -> (i32, i32) {
    %c0_i32 = arith.constant 0 : i32
    %c0_i32_0 = arith.constant 0 : i32
    return %arg0, %c0_i32 : i32, i32
  }
  func.func @transform_1(%arg0: i32) -> (i32, i32) {
    %c0_i32 = arith.constant 0 : i32
    %c0_i32_0 = arith.constant 0 : i32
    %c0_i32_1 = arith.constant 0 : i32
    return %c0_i32, %c0_i32_0 : i32, i32
  }
  func.func @transform_2(%arg0: i32) -> (i32, i32) {
    %c0_i32 = arith.constant 0 : i32
    %c0_i32_0 = arith.constant 0 : i32
    %c0_i32_1 = arith.constant 0 : i32
    return %c0_i32, %c0_i32_0 : i32, i32
  }
  func.func @transform_3(%arg0: i32) -> (i32, i32) {
    %c0_i32 = arith.constant 0 : i32
    %c0_i32_0 = arith.constant 0 : i32
    return %arg0, %c0_i32 : i32, i32
  }
}

module attributes {stable_mosaic.version = 11 : i64} {
  func.func @_max4_kernel(%arg0: i32, %arg1: memref<28x84xf32, #tpu.memory_space<vmem>>, %arg2: memref<28x84xf32, #tpu.memory_space<vmem>>, %arg3: memref<28x84xf32, #tpu.memory_space<vmem>>, %arg4: memref<28x84xf32, #tpu.memory_space<vmem>>, %arg5: memref<28x84xf32, #tpu.memory_space<vmem>>) attributes {dimension_semantics = [#tpu.dimension_semantics<parallel>], iteration_bounds = array<i64: 1>, scalar_prefetch = 0 : i64, scratch_operands = 0 : i64, tpu.core_type = #tpu.core_type<tc>, window_params = [{transform_indices = @transform_0, window_bounds = array<i64: 28, 84>}, {transform_indices = @transform_1, window_bounds = array<i64: 28, 84>}, {transform_indices = @transform_2, window_bounds = array<i64: 28, 84>}, {transform_indices = @transform_3, window_bounds = array<i64: 28, 84>}, {transform_indices = @transform_4, window_bounds = array<i64: 28, 84>}]} {
    %c0 = arith.constant 0 : index
    %c0_0 = arith.constant 0 : index
    %0 = vector.load %arg1[%c0, %c0_0] : memref<28x84xf32, #tpu.memory_space<vmem>>, vector<28x84xf32>
    %c0_1 = arith.constant 0 : index
    %c0_2 = arith.constant 0 : index
    %1 = vector.load %arg2[%c0_1, %c0_2] : memref<28x84xf32, #tpu.memory_space<vmem>>, vector<28x84xf32>
    %2 = arith.maximumf %0, %1 : vector<28x84xf32>
    %c0_3 = arith.constant 0 : index
    %c0_4 = arith.constant 0 : index
    %3 = vector.load %arg3[%c0_3, %c0_4] : memref<28x84xf32, #tpu.memory_space<vmem>>, vector<28x84xf32>
    %c0_5 = arith.constant 0 : index
    %c0_6 = arith.constant 0 : index
    %4 = vector.load %arg4[%c0_5, %c0_6] : memref<28x84xf32, #tpu.memory_space<vmem>>, vector<28x84xf32>
    %5 = arith.maximumf %3, %4 : vector<28x84xf32>
    %6 = arith.maximumf %2, %5 : vector<28x84xf32>
    %c0_7 = arith.constant 0 : index
    %c0_8 = arith.constant 0 : index
    %7 = vector.load %arg5[%c0_7, %c0_8] : memref<28x84xf32, #tpu.memory_space<vmem>>, vector<28x84xf32>
    tpu.vector_store %arg5[%c0_7, %c0_8], %6 {strides = array<i32>} : memref<28x84xf32, #tpu.memory_space<vmem>>, vector<28x84xf32>,
    return
  }
  func.func @transform_0(%arg0: i32) -> (i32, i32) {
    %c0_i32 = arith.constant 0 : i32
    %c0_i32_0 = arith.constant 0 : i32
    return %arg0, %c0_i32 : i32, i32
  }
  func.func @transform_1(%arg0: i32) -> (i32, i32) {
    %c0_i32 = arith.constant 0 : i32
    %c0_i32_0 = arith.constant 0 : i32
    return %arg0, %c0_i32 : i32, i32
  }
  func.func @transform_2(%arg0: i32) -> (i32, i32) {
    %c0_i32 = arith.constant 0 : i32
    %c0_i32_0 = arith.constant 0 : i32
    return %arg0, %c0_i32 : i32, i32
  }
  func.func @transform_3(%arg0: i32) -> (i32, i32) {
    %c0_i32 = arith.constant 0 : i32
    %c0_i32_0 = arith.constant 0 : i32
    return %arg0, %c0_i32 : i32, i32
  }
  func.func @transform_4(%arg0: i32) -> (i32, i32) {
    %c0_i32 = arith.constant 0 : i32
    %c0_i32_0 = arith.constant 0 : i32
    return %arg0, %c0_i32 : i32, i32
  }
}

module attributes {stable_mosaic.version = 11 : i64} {
  func.func @_matmul_bias_relu_kernel(%arg0: i32, %arg1: memref<200x150xbf16, #tpu.memory_space<vmem>>, %arg2: memref<150x16xbf16, #tpu.memory_space<vmem>>, %arg3: memref<1x16xf32, #tpu.memory_space<vmem>>, %arg4: memref<200x16xf32, #tpu.memory_space<vmem>>) attributes {dimension_semantics = [#tpu.dimension_semantics<parallel>], iteration_bounds = array<i64: 1>, scalar_prefetch = 0 : i64, scratch_operands = 0 : i64, tpu.core_type = #tpu.core_type<tc>, window_params = [{transform_indices = @transform_0, window_bounds = array<i64: 200, 150>}, {pipeline_mode = #tpu.pipeline_mode<synchronous>, transform_indices = @transform_1, window_bounds = array<i64: 150, 16>}, {pipeline_mode = #tpu.pipeline_mode<synchronous>, transform_indices = @transform_2, window_bounds = array<i64: 1, 16>}, {transform_indices = @transform_3, window_bounds = array<i64: 200, 16>}]} {
    %c0 = arith.constant 0 : index
    %c0_0 = arith.constant 0 : index
    %0 = vector.load %arg1[%c0, %c0_0] : memref<200x150xbf16, #tpu.memory_space<vmem>>, vector<200x150xbf16>
    %c0_1 = arith.constant 0 : index
    %c0_2 = arith.constant 0 : index
    %1 = vector.load %arg2[%c0_1, %c0_2] : memref<150x16xbf16, #tpu.memory_space<vmem>>, vector<150x16xbf16>
    %cst = arith.constant dense<0.000000e+00> : vector<200x16xf32>
    %2 = tpu.matmul %0, %1, %cst {dimension_numbers = #tpu.dot_dimension_numbers<[1], [0], [0], [1], [0, 0, 1, 1], [], []>} : vector<200x150xbf16>, vector<150x16xbf16>, vector<200x16xf32> -> vector<200x16xf32>
    %c0_3 = arith.constant 0 : index
    %c0_4 = arith.constant 0 : index
    %3 = vector.load %arg3[%c0_3, %c0_4] : memref<1x16xf32, #tpu.memory_space<vmem>>, vector<1x16xf32>
    %4 = vector.broadcast %3 : vector<1x16xf32> to vector<200x16xf32>
    %5 = arith.addf %2, %4 : vector<200x16xf32>
    %cst_5 = arith.constant 0.000000e+00 : f32
    %6 = vector.broadcast %cst_5 : f32 to vector<200x16xf32>
    %7 = arith.maximumf %5, %6 : vector<200x16xf32>
    %c0_6 = arith.constant 0 : index
    %c0_7 = arith.constant 0 : index
    %8 = vector.load %arg4[%c0_6, %c0_7] : memref<200x16xf32, #tpu.memory_space<vmem>>, vector<200x16xf32>
    tpu.vector_store %arg4[%c0_6, %c0_7], %7 {strides = array<i32>} : memref<200x16xf32, #tpu.memory_space<vmem>>, vector<200x16xf32>,
    return
  }
  func.func @transform_0(%arg0: i32) -> (i32, i32) {
    %c0_i32 = arith.constant 0 : i32
    %c0_i32_0 = arith.constant 0 : i32
    return %arg0, %c0_i32 : i32, i32
  }
  func.func @transform_1(%arg0: i32) -> (i32, i32) {
    %c0_i32 = arith.constant 0 : i32
    %c0_i32_0 = arith.constant 0 : i32
    %c0_i32_1 = arith.constant 0 : i32
    return %c0_i32, %c0_i32_0 : i32, i32
  }
  func.func @transform_2(%arg0: i32) -> (i32, i32) {
    %c0_i32 = arith.constant 0 : i32
    %c0_i32_0 = arith.constant 0 : i32
    %c0_i32_1 = arith.constant 0 : i32
    return %c0_i32, %c0_i32_0 : i32, i32
  }
  func.func @transform_3(%arg0: i32) -> (i32, i32) {
    %c0_i32 = arith.constant 0 : i32
    %c0_i32_0 = arith.constant 0 : i32
    return %arg0, %c0_i32 : i32, i32
  }
}

module attributes {stable_mosaic.version = 11 : i64} {
  func.func @_pool_fc_stack_kernel(%arg0: i32, %arg1: memref<2x400xf32, #tpu.memory_space<vmem>>, %arg2: memref<2x400xf32, #tpu.memory_space<vmem>>, %arg3: memref<2x400xf32, #tpu.memory_space<vmem>>, %arg4: memref<2x400xf32, #tpu.memory_space<vmem>>, %arg5: memref<400x120xbf16, #tpu.memory_space<vmem>>, %arg6: memref<1x120xf32, #tpu.memory_space<vmem>>, %arg7: memref<120x84xbf16, #tpu.memory_space<vmem>>, %arg8: memref<1x84xf32, #tpu.memory_space<vmem>>, %arg9: memref<84x11xbf16, #tpu.memory_space<vmem>>, %arg10: memref<1x11xf32, #tpu.memory_space<vmem>>, %arg11: memref<2x11xf32, #tpu.memory_space<vmem>>) attributes {dimension_semantics = [#tpu.dimension_semantics<parallel>], iteration_bounds = array<i64: 1>, scalar_prefetch = 0 : i64, scratch_operands = 0 : i64, tpu.core_type = #tpu.core_type<tc>, window_params = [{transform_indices = @transform_0, window_bounds = array<i64: 2, 400>}, {transform_indices = @transform_1, window_bounds = array<i64: 2, 400>}, {transform_indices = @transform_2, window_bounds = array<i64: 2, 400>}, {transform_indices = @transform_3, window_bounds = array<i64: 2, 400>}, {pipeline_mode = #tpu.pipeline_mode<synchronous>, transform_indices = @transform_4, window_bounds = array<i64: 400, 120>}, {pipeline_mode = #tpu.pipeline_mode<synchronous>, transform_indices = @transform_5, window_bounds = array<i64: 1, 120>}, {pipeline_mode = #tpu.pipeline_mode<synchronous>, transform_indices = @transform_6, window_bounds = array<i64: 120, 84>}, {pipeline_mode = #tpu.pipeline_mode<synchronous>, transform_indices = @transform_7, window_bounds = array<i64: 1, 84>}, {pipeline_mode = #tpu.pipeline_mode<synchronous>, transform_indices = @transform_8, window_bounds = array<i64: 84, 11>}, {pipeline_mode = #tpu.pipeline_mode<synchronous>, transform_indices = @transform_9, window_bounds = array<i64: 1, 11>}, {transform_indices = @transform_10, window_bounds = array<i64: 2, 11>}]} {
    %c0 = arith.constant 0 : index
    %c0_0 = arith.constant 0 : index
    %0 = vector.load %arg1[%c0, %c0_0] : memref<2x400xf32, #tpu.memory_space<vmem>>, vector<2x400xf32>
    %c0_1 = arith.constant 0 : index
    %c0_2 = arith.constant 0 : index
    %1 = vector.load %arg2[%c0_1, %c0_2] : memref<2x400xf32, #tpu.memory_space<vmem>>, vector<2x400xf32>
    %2 = arith.maximumf %0, %1 : vector<2x400xf32>
    %c0_3 = arith.constant 0 : index
    %c0_4 = arith.constant 0 : index
    %3 = vector.load %arg3[%c0_3, %c0_4] : memref<2x400xf32, #tpu.memory_space<vmem>>, vector<2x400xf32>
    %c0_5 = arith.constant 0 : index
    %c0_6 = arith.constant 0 : index
    %4 = vector.load %arg4[%c0_5, %c0_6] : memref<2x400xf32, #tpu.memory_space<vmem>>, vector<2x400xf32>
    %5 = arith.maximumf %3, %4 : vector<2x400xf32>
    %6 = arith.maximumf %2, %5 : vector<2x400xf32>
    %7 = arith.truncf %6 : vector<2x400xf32> to vector<2x400xbf16>
    %c0_7 = arith.constant 0 : index
    %c0_8 = arith.constant 0 : index
    %8 = vector.load %arg5[%c0_7, %c0_8] : memref<400x120xbf16, #tpu.memory_space<vmem>>, vector<400x120xbf16>
    %cst = arith.constant dense<0.000000e+00> : vector<2x120xf32>
    %9 = tpu.matmul %7, %8, %cst {dimension_numbers = #tpu.dot_dimension_numbers<[1], [0], [0], [1], [0, 0, 1, 1], [], []>} : vector<2x400xbf16>, vector<400x120xbf16>, vector<2x120xf32> -> vector<2x120xf32>
    %c0_9 = arith.constant 0 : index
    %c0_10 = arith.constant 0 : index
    %10 = vector.load %arg6[%c0_9, %c0_10] : memref<1x120xf32, #tpu.memory_space<vmem>>, vector<1x120xf32>
    %11 = vector.broadcast %10 : vector<1x120xf32> to vector<2x120xf32>
    %12 = arith.addf %9, %11 : vector<2x120xf32>
    %cst_11 = arith.constant 0.000000e+00 : f32
    %13 = vector.broadcast %cst_11 : f32 to vector<2x120xf32>
    %14 = arith.maximumf %12, %13 : vector<2x120xf32>
    %15 = arith.truncf %14 : vector<2x120xf32> to vector<2x120xbf16>
    %c0_12 = arith.constant 0 : index
    %c0_13 = arith.constant 0 : index
    %16 = vector.load %arg7[%c0_12, %c0_13] : memref<120x84xbf16, #tpu.memory_space<vmem>>, vector<120x84xbf16>
    %cst_14 = arith.constant dense<0.000000e+00> : vector<2x84xf32>
    %17 = tpu.matmul %15, %16, %cst_14 {dimension_numbers = #tpu.dot_dimension_numbers<[1], [0], [0], [1], [0, 0, 1, 1], [], []>} : vector<2x120xbf16>, vector<120x84xbf16>, vector<2x84xf32> -> vector<2x84xf32>
    %c0_15 = arith.constant 0 : index
    %c0_16 = arith.constant 0 : index
    %18 = vector.load %arg8[%c0_15, %c0_16] : memref<1x84xf32, #tpu.memory_space<vmem>>, vector<1x84xf32>
    %19 = vector.broadcast %18 : vector<1x84xf32> to vector<2x84xf32>
    %20 = arith.addf %17, %19 : vector<2x84xf32>
    %cst_17 = arith.constant 0.000000e+00 : f32
    %21 = vector.broadcast %cst_17 : f32 to vector<2x84xf32>
    %22 = arith.maximumf %20, %21 : vector<2x84xf32>
    %23 = arith.truncf %22 : vector<2x84xf32> to vector<2x84xbf16>
    %c0_18 = arith.constant 0 : index
    %c0_19 = arith.constant 0 : index
    %24 = vector.load %arg9[%c0_18, %c0_19] : memref<84x11xbf16, #tpu.memory_space<vmem>>, vector<84x11xbf16>
    %cst_20 = arith.constant dense<0.000000e+00> : vector<2x11xf32>
    %25 = tpu.matmul %23, %24, %cst_20 {dimension_numbers = #tpu.dot_dimension_numbers<[1], [0], [0], [1], [0, 0, 1, 1], [], []>} : vector<2x84xbf16>, vector<84x11xbf16>, vector<2x11xf32> -> vector<2x11xf32>
    %c0_21 = arith.constant 0 : index
    %c0_22 = arith.constant 0 : index
    %26 = vector.load %arg10[%c0_21, %c0_22] : memref<1x11xf32, #tpu.memory_space<vmem>>, vector<1x11xf32>
    %27 = vector.broadcast %26 : vector<1x11xf32> to vector<2x11xf32>
    %28 = arith.addf %25, %27 : vector<2x11xf32>
    %c0_23 = arith.constant 0 : index
    %c0_24 = arith.constant 0 : index
    %29 = vector.load %arg11[%c0_23, %c0_24] : memref<2x11xf32, #tpu.memory_space<vmem>>, vector<2x11xf32>
    tpu.vector_store %arg11[%c0_23, %c0_24], %28 {strides = array<i32>} : memref<2x11xf32, #tpu.memory_space<vmem>>, vector<2x11xf32>,
    return
  }
  func.func @transform_0(%arg0: i32) -> (i32, i32) {
    %c0_i32 = arith.constant 0 : i32
    %c0_i32_0 = arith.constant 0 : i32
    return %arg0, %c0_i32 : i32, i32
  }
  func.func @transform_1(%arg0: i32) -> (i32, i32) {
    %c0_i32 = arith.constant 0 : i32
    %c0_i32_0 = arith.constant 0 : i32
    return %arg0, %c0_i32 : i32, i32
  }
  func.func @transform_2(%arg0: i32) -> (i32, i32) {
    %c0_i32 = arith.constant 0 : i32
    %c0_i32_0 = arith.constant 0 : i32
    return %arg0, %c0_i32 : i32, i32
  }
  func.func @transform_3(%arg0: i32) -> (i32, i32) {
    %c0_i32 = arith.constant 0 : i32
    %c0_i32_0 = arith.constant 0 : i32
    return %arg0, %c0_i32 : i32, i32
  }
  func.func @transform_4(%arg0: i32) -> (i32, i32) {
    %c0_i32 = arith.constant 0 : i32
    %c0_i32_0 = arith.constant 0 : i32
    %c0_i32_1 = arith.constant 0 : i32
    return %c0_i32, %c0_i32_0 : i32, i32
  }
  func.func @transform_5(%arg0: i32) -> (i32, i32) {
    %c0_i32 = arith.constant 0 : i32
    %c0_i32_0 = arith.constant 0 : i32
    %c0_i32_1 = arith.constant 0 : i32
    return %c0_i32, %c0_i32_0 : i32, i32
  }
  func.func @transform_6(%arg0: i32) -> (i32, i32) {
    %c0_i32 = arith.constant 0 : i32
    %c0_i32_0 = arith.constant 0 : i32
    %c0_i32_1 = arith.constant 0 : i32
    return %c0_i32, %c0_i32_0 : i32, i32
  }
  func.func @transform_7(%arg0: i32) -> (i32, i32) {
    %c0_i32 = arith.constant 0 : i32
    %c0_i32_0 = arith.constant 0 : i32
    %c0_i32_1 = arith.constant 0 : i32
    return %c0_i32, %c0_i32_0 : i32, i32
  }
  func.func @transform_8(%arg0: i32) -> (i32, i32) {
    %c0_i32 = arith.constant 0 : i32
    %c0_i32_0 = arith.constant 0 : i32
    %c0_i32_1 = arith.constant 0 : i32
    return %c0_i32, %c0_i32_0 : i32, i32
  }
  func.func @transform_9(%arg0: i32) -> (i32, i32) {
    %c0_i32 = arith.constant 0 : i32
    %c0_i32_0 = arith.constant 0 : i32
    %c0_i32_1 = arith.constant 0 : i32
    return %c0_i32, %c0_i32_0 : i32, i32
  }
  func.func @transform_10(%arg0: i32) -> (i32, i32) {
    %c0_i32 = arith.constant 0 : i32
    %c0_i32_0 = arith.constant 0 : i32
    return %arg0, %c0_i32 : i32, i32
  }
}

</mosaic_0001>

<llo_original>
// kernel: cnn_forward.4
$region0: #{cnn_forward.4}
  #allocation0 [shape = 'u32[]', space=smem, size = 0x4, offset = 0x4, fixed_abs, tag = 'smem constant byte address 0x4 - core index']
  #allocation1 [shape = 'u32[144,128]{1,0:T(1,128)}', space=vmem, size = 0x12000, scoped, tag = 'internal scratch']
  %s0 = inlined_call_operand.vmem [shape: bf16[1568,75], index: 0, kind: input, shape index: {}]
  %s1 = inlined_call_operand.vmem [shape: bf16[75,6], index: 1, kind: input, shape index: {}]
  %s2 = inlined_call_operand.vmem [shape: f32[1,6], index: 2, kind: input, shape index: {}]
  %s3 = inlined_call_operand.vmem [shape: f32[1568,6], index: 3, kind: output, shape index: {}]
  %s4 = sld [smem:[#allocation0]]
  $region93: #{cnn_forward.4} parent=0
    _
  %s6 = ssub.s32 1, %s4
  %s7 = scalar_select 0, %s6, %s4
  $region1: #{cnn_forward.4} parent=0
    #allocation2 [shape = 'u8[524288]{0}', space=vmem, size = 0x80000, scoped, tag = 'output window, operand 0']
    loop: start=0, step=1, limit=6
    $region2: #{cnn_forward.4} parent=1 // loop_pre_header
      _
    $region3: #{cnn_forward.4} parent=1 // loop_header
      %s9 = sphi 0, %s13
      %p10 = scmp.ge.s32.totalorder %s9, 6
      %s19 = sphi 0, %s21
      %s22 = sphi 0, %s19
      %s23 = sphi 0, %s22
      %s39 = sphi 0, %s23
      %s43 = sphi 0, %s43
      %s45 = sphi 0, %s43
      %s46 = sphi 0, %s45
      %s60 = sphi 0, %s46
      %s64 = sphi 0, %s64
      %s66 = sphi 0, %s64
      %s67 = sphi 0, %s66
      %s81 = sphi 0, %s67
      %s87 = sphi 0, %s89
      %s90 = sphi 0, %s87
      %s91 = sphi 0, %s90
      %s107 = sphi 0, %s91
    $region4: #{cnn_forward.4} parent=1 // loop_header_branch
      %12 = sbr.rel (%p10) target = $region8
    $region5: #{cnn_forward.4} parent=1 // loop_body
      %s14 = ssub.s32 %s9, 1
      %s15 = ssub.s32 %s9, 2
      %s16 = sadd.s32 %s9, 1
      %s17 = ssub.s32 %s9, %s16
      %p18 = scmp.eq.s32.totalorder %s17, 0
      %s20 = sadd.s32 %s19, 1
      %s21 = scalar_select %p18, %s19, %s20
      %p24 = pneg %p18
      %p25 = scmp.eq.s32.totalorder %s9, 3
      %p26 = por %p24, %p25
      %p27 = scmp.ne.s32.totalorder %s19, %s22
      %p28 = scmp.eq.s32.totalorder %s9, 0
      %p29 = por %p27, %p28
      %p30 = scmp.ne.s32.totalorder %s19, %s22
      %p31 = scmp.eq.s32.totalorder %s14, 3
      %p32 = por %p30, %p31
      %p33 = scmp.ne.s32.totalorder %s22, %s23
      %p34 = scmp.eq.s32.totalorder %s14, 0
      %p35 = por %p33, %p34
      %p36 = scmp.ne.s32.totalorder %s22, %s23
      %p37 = scmp.eq.s32.totalorder %s15, 3
      %p38 = por %p36, %p37
      %p40 = scmp.ne.s32.totalorder %s23, %s39
      %p41 = scmp.eq.s32.totalorder %s15, 0
      %p42 = por %p40, %p41
      %s44 = sadd.s32 %s43, 1
      %p47 = scmp.eq.s32.totalorder %s9, 3
      %p48 = scmp.ne.s32.totalorder %s43, %s45
      %p49 = scmp.eq.s32.totalorder %s9, 0
      %p50 = por %p48, %p49
      %p51 = scmp.ne.s32.totalorder %s43, %s45
      %p52 = scmp.eq.s32.totalorder %s14, 3
      %p53 = por %p51, %p52
      %p54 = scmp.ne.s32.totalorder %s45, %s46
      %p55 = scmp.eq.s32.totalorder %s14, 0
      %p56 = por %p54, %p55
      %p57 = scmp.ne.s32.totalorder %s45, %s46
      %p58 = scmp.eq.s32.totalorder %s15, 3
      %p59 = por %p57, %p58
      %p61 = scmp.ne.s32.totalorder %s46, %s60
      %p62 = scmp.eq.s32.totalorder %s15, 0
      %p63 = por %p61, %p62
      %s65 = sadd.s32 %s64, 1
      %p68 = scmp.eq.s32.totalorder %s9, 3
      %p69 = scmp.ne.s32.totalorder %s64, %s66
      %p70 = scmp.eq.s32.totalorder %s9, 0
      %p71 = por %p69, %p70
      %p72 = scmp.ne.s32.totalorder %s64, %s66
      %p73 = scmp.eq.s32.totalorder %s14, 3
      %p74 = por %p72, %p73
      %p75 = scmp.ne.s32.totalorder %s66, %s67
      %p76 = scmp.eq.s32.totalorder %s14, 0
      %p77 = por %p75, %p76
      %p78 = scmp.ne.s32.totalorder %s66, %s67
      %p79 = scmp.eq.s32.totalorder %s15, 3
      %p80 = por %p78, %p79
      %p82 = scmp.ne.s32.totalorder %s67, %s81
      %p83 = scmp.eq.s32.totalorder %s15, 0
      %p84 = por %p82, %p83
      %s85 = ssub.s32 %s9, %s16
      %p86 = scmp.eq.s32.totalorder %s85, 0
      %s88 = sadd.s32 %s87, 1
      %s89 = scalar_select %p86, %s87, %s88
      %p92 = pneg %p86
      %p93 = scmp.eq.s32.totalorder %s9, 3
      %p94 = por %p92, %p93
      %p95 = scmp.ne.s32.totalorder %s87, %s90
      %p96 = scmp.eq.s32.totalorder %s9, 0
      %p97 = por %p95, %p96
      %p98 = scmp.ne.s32.totalorder %s87, %s90
      %p99 = scmp.eq.s32.totalorder %s14, 3
      %p100 = por %p98, %p99
      %p101 = scmp.ne.s32.totalorder %s90, %s91
      %p102 = scmp.eq.s32.totalorder %s14, 0
      %p103 = por %p101, %p102
      %p104 = scmp.ne.s32.totalorder %s90, %s91
      %p105 = scmp.eq.s32.totalorder %s15, 3
      %p106 = por %p104, %p105
      %p108 = scmp.ne.s32.totalorder %s91, %s107
      %p109 = scmp.eq.s32.totalorder %s15, 0
      %p110 = por %p108, %p109
      %p111 = scmp.le.s32.totalorder 1, %s9
      %p112 = scmp.lt.s32.totalorder %s9, 5
      %p113 = pnand %p111, %p112
      %p114 = pneg %p113
      // Predicated region
      $region9: #{cnn_forward.4} parent=5 // pred_check
        _
      $region10: #{cnn_forward.4} parent=5 // pred_check_branch
        %116 = sbr.rel (%p113) target = $region12
      $region11: #{cnn_forward.4} parent=5 // pred_region
        %s117 = ssub.s32 %s9, 1
        // Predicated region
        $region13: #{cnn_forward.4} parent=11 // pred_check
          %p118 = pneg %p56
        $region14: #{cnn_forward.4} parent=11 // pred_check_branch
          %120 = sbr.rel (%p118) target = $region16
        $region15: #{cnn_forward.4} parent=11 // pred_region
          _
        $region16: #{cnn_forward.4} parent=11 // pred_fallthru
          _
        // Predicated region
        $region17: #{cnn_forward.4} parent=11 // pred_check
          %p121 = pneg %p77
        $region18: #{cnn_forward.4} parent=11 // pred_check_branch
          %123 = sbr.rel (%p121) target = $region20
        $region19: #{cnn_forward.4} parent=11 // pred_region
          _
        $region20: #{cnn_forward.4} parent=11 // pred_fallthru
          _
      $region12: #{cnn_forward.4} parent=5 // pred_fallthru
        _
      %p124 = scmp.lt.s32.totalorder %s9, 4
      // Predicated region
      $region21: #{cnn_forward.4} parent=5 // pred_check
        %p125 = pneg %p124
      $region22: #{cnn_forward.4} parent=5 // pred_check_branch
        %127 = sbr.rel (%p125) target = $region24
      $region23: #{cnn_forward.4} parent=5 // pred_region
        // Predicated region
        $region25: #{cnn_forward.4} parent=23 // pred_check
          %p128 = pneg %p29
        $region26: #{cnn_forward.4} parent=23 // pred_check_branch
          %130 = sbr.rel (%p128) target = $region28
        $region27: #{cnn_forward.4} parent=23 // pred_region
          %s131 = smul.u32 64, %s9
          %s132 = ssub.s32 196, %s131
          %p133 = scmp.lt.s32.totalorder %s132, 64
          %s134 = scalar_select %p133, %s132, 64
          %s135 = smul.u32 64, %s134
          %p136 = scmp.lt.s32.totalorder %s131, 195
          %s137 = scalar_select %p136, %s131, 195
          %s138 = smul.addr %s137, 4
          %s139 = scalar_lea.vmem %s0, %s138
          %s140 = smul.u32 64, %s9
          %s141 = ssub.s32 196, %s140
          %p142 = scmp.lt.s32.totalorder %s141, 64
          %s143 = scalar_select %p142, %s141, 64
          %s144 = smul.u32 64, %s143
        $region28: #{cnn_forward.4} parent=23 // pred_fallthru
          _
      $region24: #{cnn_forward.4} parent=5 // pred_fallthru
        _
      %p145 = scmp.le.s32.totalorder 1, %s9
      %p146 = scmp.lt.s32.totalorder %s9, 5
      %p147 = pnand %p145, %p146
      %p148 = pneg %p147
      // Predicated region
      $region29: #{cnn_forward.4} parent=5 // pred_check
        _
      $region30: #{cnn_forward.4} parent=5 // pred_check_branch
        %150 = sbr.rel (%p147) target = $region32
      $region31: #{cnn_forward.4} parent=5 // pred_region
        %s151 = ssub.s32 %s9, 1
        %s152 = smul.u32 64, %s14
        %s153 = ssub.s32 196, %s152
        %p154 = scmp.lt.s32.totalorder %s153, 64
        %s155 = scalar_select %p154, %s153, 64
        %s156 = smul.u32 64, %s155
        %p157 = scmp.lt.s32.totalorder %s152, 195
        %s158 = scalar_select %p157, %s152, 195
        %s159 = smul.addr %s158, 4
        %s160 = scalar_lea.vmem %s0, %s159
        %p161 = pneg %p35
        %p162 = pneg %p32
        %p163 = pneg %p56
        %p164 = pneg %p53
        %p165 = pneg %p77
        %p166 = pneg %p74
        %p167 = pneg %p103
        %p168 = pneg %p100
        %s169 = sand.u32 %s90, 1
        %s170 = sand.u32 %s90, 1
        %s171 = smul.addr %s170, 512
        %s172 = scalar_lea.vmem [#allocation2], %s171
        %s173 = smul.u32 64, %s14
        %s174 = ssub.s32 196, %s173
        %p175 = scmp.lt.s32.totalorder %s174, 64
        %s176 = scalar_select %p175, %s174, 64
        %s177 = smul.u32 64, %s176
        %p178 = scmp.lt.s32.totalorder %s173, 195
        %s179 = scalar_select %p178, %s173, 195
        %s180 = smul.addr %s179, 4
        %s181 = scalar_lea.vmem %s0, %s180
        %s182 = smul.u32 64, %s14
        %s183 = ssub.s32 196, %s182
        %p184 = scmp.lt.s32.totalorder %s183, 64
        %s185 = scalar_select %p184, %s183, 64
        %s186 = smul.u32 64, %s185
        %s187 = smul.u32 64, %s14
        %s188 = ssub.s32 196, %s187
        %p189 = scmp.lt.s32.totalorder %s188, 64
        %s190 = scalar_select %p189, %s188, 64
        %s191 = smul.u32 128, %s190
        %v193 = vld [vmem:[%s181] sm:$0xf]
        %v194 = vld [vmem:[%s181 + $0x4] sm:$0xf]
        %v195 = vld [vmem:[%s181 + $0x8] sm:$0xf]
        %v196 = vld [vmem:[%s181 + $0xc] sm:$0xf]
        %v197 = vld [vmem:[%s181 + $0x10] sm:$0xf]
        %v198 = vld [vmem:[%s181 + $0x14] sm:$0xf]
        %v199 = vld [vmem:[%s181 + $0x18] sm:$0xf]
        %v200 = vld [vmem:[%s181 + $0x1c] sm:$0xf]
        %v201 = vld [vmem:[%s181 + $0x20] sm:$0xf]
        %v202 = vld [vmem:[%s181 + $0x24] sm:$0xf]
        %v203 = vld [vmem:[%s181 + $0x28] sm:$0xf]
        %v204 = vld [vmem:[%s181 + $0x2c] sm:$0xf]
        %v205 = vld [vmem:[%s181 + $0x30] sm:$0xf]
        %v206 = vld [vmem:[%s181 + $0x34] sm:$0xf]
        %v207 = vld [vmem:[%s181 + $0x38] sm:$0xf]
        %v208 = vld [vmem:[%s181 + $0x3c] sm:$0xf]
        %v209 = vld [vmem:[%s181 + $0x40] sm:$0xf]
        %v210 = vld [vmem:[%s181 + $0x44] sm:$0xf]
        %v211 = vld [vmem:[%s181 + $0x48] sm:$0xf]
        %v212 = vld [vmem:[%s181 + $0x4c] sm:$0xf]
        %v213 = vld [vmem:[%s181 + $0x50] sm:$0xf]
        %v214 = vld [vmem:[%s181 + $0x54] sm:$0xf]
        %v215 = vld [vmem:[%s181 + $0x58] sm:$0xf]
        %v216 = vld [vmem:[%s181 + $0x5c] sm:$0xf]
        %v217 = vld [vmem:[%s181 + $0x60] sm:$0xf]
        %v218 = vld [vmem:[%s181 + $0x64] sm:$0xf]
        %v219 = vld [vmem:[%s181 + $0x68] sm:$0xf]
        %v220 = vld [vmem:[%s181 + $0x6c] sm:$0xf]
        %v221 = vld [vmem:[%s181 + $0x70] sm:$0xf]
        %v222 = vld [vmem:[%s181 + $0x74] sm:$0xf]
        %v223 = vld [vmem:[%s181 + $0x78] sm:$0xf]
        %v224 = vld [vmem:[%s181 + $0x7c] sm:$0xf]
        %v225 = vld [vmem:[%s181 + $0x80] sm:$0xf]
        %v226 = vld [vmem:[%s181 + $0x84] sm:$0xf]
        %v227 = vld [vmem:[%s181 + $0x88] sm:$0xf]
        %v228 = vld [vmem:[%s181 + $0x8c] sm:$0xf]
        %v229 = vld [vmem:[%s181 + $0x90] sm:$0xf]
        %v230 = vld [vmem:[%s181 + $0x94] sm:$0xf]
        %v231 = vld [vmem:[%s181 + $0x98] sm:$0xf]
        %v232 = vld [vmem:[%s181 + $0x9c] sm:$0xf]
        %v233 = vld [vmem:[%s181 + $0xa0] sm:$0xf]
        %v234 = vld [vmem:[%s181 + $0xa4] sm:$0xf]
        %v235 = vld [vmem:[%s181 + $0xa8] sm:$0xf]
        %v236 = vld [vmem:[%s181 + $0xac] sm:$0xf]
        %v237 = vld [vmem:[%s181 + $0xb0] sm:$0xf]
        %v238 = vld [vmem:[%s181 + $0xb4] sm:$0xf]
        %v239 = vld [vmem:[%s181 + $0xb8] sm:$0xf]
        %v240 = vld [vmem:[%s181 + $0xbc] sm:$0xf]
        %v241 = vld [vmem:[%s181 + $0xc0] sm:$0xf]
        %v242 = vld [vmem:[%s181 + $0xc4] sm:$0xf]
        %v243 = vld [vmem:[%s181 + $0xc8] sm:$0xf]
        %v244 = vld [vmem:[%s181 + $0xcc] sm:$0xf]
        %v245 = vld [vmem:[%s181 + $0xd0] sm:$0xf]
        %v246 = vld [vmem:[%s181 + $0xd4] sm:$0xf]
        %v247 = vld [vmem:[%s181 + $0xd8] sm:$0xf]
        %v248 = vld [vmem:[%s181 + $0xdc] sm:$0xf]
        %v249 = vld [vmem:[%s181 + $0xe0] sm:$0xf]
        %v250 = vld [vmem:[%s181 + $0xe4] sm:$0xf]
        %v251 = vld [vmem:[%s181 + $0xe8] sm:$0xf]
        %v252 = vld [vmem:[%s181 + $0xec] sm:$0xf]
        %v253 = vld [vmem:[%s181 + $0xf0] sm:$0xf]
        %v254 = vld [vmem:[%s181 + $0xf4] sm:$0xf]
        %v255 = vld [vmem:[%s181 + $0xf8] sm:$0xf]
        %v256 = vld [vmem:[%s181 + $0xfc] sm:$0xf]
        %v257 = vld [vmem:[%s1] sm:$0xf]
        %v258 = vld [vmem:[%s1 + $0x4] sm:$0xf]
        %v259 = vld [vmem:[%s1 + $0x8] sm:$0xf]
        %v260 = vld [vmem:[%s1 + $0xc] sm:$0xf]
        %v261 = vld [vmem:[%s1 + $0x10] sm:$0xf]
        %v262 = vld [vmem:[%s1 + $0x14] sm:$0xf]
        %v263 = vld [vmem:[%s1 + $0x18] sm:$0xf]
        %v264 = vld [vmem:[%s1 + $0x1c] sm:$0xf]
        %v265 = vld [vmem:[%s1 + $0x20] sm:$0xf]
        %v266 = vld [vmem:[%s1 + $0x24] sm:$0x3]
        %v267 = vld [vmem:[%s2] sm:$0x1]
        %v269 = vlaneseq
        %v270 = vshrl.u32 %v269, 7
        %v271 = vsub.s32 0, %v270
        %v272 = vrot.slane %v267, %v271
        %v338 = vunpack.c.l.b16 %v193
        %v339 = vunpack.c.l.b16 %v194
        %v340 = vunpack.c.l.b16 %v195
        %v341 = vunpack.c.l.b16 %v196
        %v342 = vunpack.c.l.b16 %v197
        %v343 = vunpack.c.l.b16 %v198
        %v344 = vunpack.c.l.b16 %v199
        %v345 = vunpack.c.l.b16 %v200
        %v346 = vunpack.c.l.b16 %v201
        %v347 = vunpack.c.l.b16 %v202
        %v348 = vunpack.c.l.b16 %v203
        %v349 = vunpack.c.l.b16 %v204
        %v350 = vunpack.c.l.b16 %v205
        %v351 = vunpack.c.l.b16 %v206
        %v352 = vunpack.c.l.b16 %v207
        %v353 = vunpack.c.l.b16 %v208
        %v354 = vunpack.c.l.b16 %v209
        %v355 = vunpack.c.l.b16 %v210
        %v356 = vunpack.c.l.b16 %v211
        %v357 = vunpack.c.l.b16 %v212
        %v358 = vunpack.c.l.b16 %v213
        %v359 = vunpack.c.l.b16 %v214
        %v360 = vunpack.c.l.b16 %v215
        %v361 = vunpack.c.l.b16 %v216
        %v362 = vunpack.c.l.b16 %v217
        %v363 = vunpack.c.l.b16 %v218
        %v364 = vunpack.c.l.b16 %v219
        %v365 = vunpack.c.l.b16 %v220
        %v366 = vunpack.c.l.b16 %v221
        %v367 = vunpack.c.l.b16 %v222
        %v368 = vunpack.c.l.b16 %v223
        %v369 = vunpack.c.l.b16 %v224
        %v370 = vunpack.c.l.b16 %v225
        %v371 = vunpack.c.l.b16 %v226
        %v372 = vunpack.c.l.b16 %v227
        %v373 = vunpack.c.l.b16 %v228
        %v374 = vunpack.c.l.b16 %v229
        %v375 = vunpack.c.l.b16 %v230
        %v376 = vunpack.c.l.b16 %v231
        %v377 = vunpack.c.l.b16 %v232
        %v378 = vunpack.c.l.b16 %v233
        %v379 = vunpack.c.l.b16 %v234
        %v380 = vunpack.c.l.b16 %v235
        %v381 = vunpack.c.l.b16 %v236
        %v382 = vunpack.c.l.b16 %v237
        %v383 = vunpack.c.l.b16 %v238
        %v384 = vunpack.c.l.b16 %v239
        %v385 = vunpack.c.l.b16 %v240
        %v386 = vunpack.c.l.b16 %v241
        %v387 = vunpack.c.l.b16 %v242
        %v388 = vunpack.c.l.b16 %v243
        %v389 = vunpack.c.l.b16 %v244
        %v390 = vunpack.c.l.b16 %v245
        %v391 = vunpack.c.l.b16 %v246
        %v392 = vunpack.c.l.b16 %v247
        %v393 = vunpack.c.l.b16 %v248
        %v394 = vunpack.c.l.b16 %v249
        %v395 = vunpack.c.l.b16 %v250
        %v396 = vunpack.c.l.b16 %v251
        %v397 = vunpack.c.l.b16 %v252
        %v398 = vunpack.c.l.b16 %v253
        %v399 = vunpack.c.l.b16 %v254
        %v400 = vunpack.c.l.b16 %v255
        %v401 = vunpack.c.l.b16 %v256
        %v402 = vpack.c.b16 %v339, %v338
        %v403 = vpack.c.b16 %v341, %v340
        %v404 = vpack.c.b16 %v343, %v342
        %v405 = vpack.c.b16 %v345, %v344
        %v406 = vpack.c.b16 %v347, %v346
        %v407 = vpack.c.b16 %v349, %v348
        %v408 = vpack.c.b16 %v351, %v350
        %v409 = vpack.c.b16 %v353, %v352
        %v410 = vpack.c.b16 %v355, %v354
        %v411 = vpack.c.b16 %v357, %v356
        %v412 = vpack.c.b16 %v359, %v358
        %v413 = vpack.c.b16 %v361, %v360
        %v414 = vpack.c.b16 %v363, %v362
        %v415 = vpack.c.b16 %v365, %v364
        %v416 = vpack.c.b16 %v367, %v366
        %v417 = vpack.c.b16 %v369, %v368
        %v418 = vpack.c.b16 %v371, %v370
        %v419 = vpack.c.b16 %v373, %v372
        %v420 = vpack.c.b16 %v375, %v374
        %v421 = vpack.c.b16 %v377, %v376
        %v422 = vpack.c.b16 %v379, %v378
        %v423 = vpack.c.b16 %v381, %v380
        %v424 = vpack.c.b16 %v383, %v382
        %v425 = vpack.c.b16 %v385, %v384
        %v426 = vpack.c.b16 %v387, %v386
        %v427 = vpack.c.b16 %v389, %v388
        %v428 = vpack.c.b16 %v391, %v390
        %v429 = vpack.c.b16 %v393, %v392
        %v430 = vpack.c.b16 %v395, %v394
        %v431 = vpack.c.b16 %v397, %v396
        %v432 = vpack.c.b16 %v399, %v398
        %v433 = vpack.c.b16 %v401, %v400
        %v444 = vunpack.c.l.b16 %v257
        %v445 = vunpack.c.l.b16 %v258
        %v446 = vunpack.c.l.b16 %v259
        %v447 = vunpack.c.l.b16 %v260
        %v448 = vunpack.c.l.b16 %v261
        %v449 = vunpack.c.l.b16 %v262
        %v450 = vunpack.c.l.b16 %v263
        %v451 = vunpack.c.l.b16 %v264
        %v452 = vunpack.c.l.b16 %v265
        %v453 = vunpack.c.l.b16 %v266
        %v454 = vpack.c.b16 %v445, %v444
        %v455 = vpack.c.b16 %v447, %v446
        %v456 = vpack.c.b16 %v449, %v448
        %v457 = vpack.c.b16 %v451, %v450
        %v458 = vpack.c.b16 %v453, %v452
        %vm463 = vcmask 613376
        %v465 = vsel %vm463, %v402, 0
        %v468 = vsel %vm463, %v403, 0
        %v471 = vsel %vm463, %v404, 0
        %v474 = vsel %vm463, %v405, 0
        %v477 = vsel %vm463, %v406, 0
        %v480 = vsel %vm463, %v407, 0
        %v483 = vsel %vm463, %v408, 0
        %v486 = vsel %vm463, %v409, 0
        %v489 = vsel %vm463, %v410, 0
        %v492 = vsel %vm463, %v411, 0
        %v495 = vsel %vm463, %v412, 0
        %v498 = vsel %vm463, %v413, 0
        %v501 = vsel %vm463, %v414, 0
        %v504 = vsel %vm463, %v415, 0
        %v507 = vsel %vm463, %v416, 0
        %v510 = vsel %vm463, %v417, 0
        %v513 = vsel %vm463, %v418, 0
        %v516 = vsel %vm463, %v419, 0
        %v519 = vsel %vm463, %v420, 0
        %v522 = vsel %vm463, %v421, 0
        %v525 = vsel %vm463, %v422, 0
        %v528 = vsel %vm463, %v423, 0
        %v531 = vsel %vm463, %v424, 0
        %v534 = vsel %vm463, %v425, 0
        %v537 = vsel %vm463, %v426, 0
        %v540 = vsel %vm463, %v427, 0
        %v543 = vsel %vm463, %v428, 0
        %v546 = vsel %vm463, %v429, 0
        %v549 = vsel %vm463, %v430, 0
        %v552 = vsel %vm463, %v431, 0
        %v555 = vsel %vm463, %v432, 0
        %v558 = vsel %vm463, %v433, 0
        %vm560 = vcmask 1044480
        %vm561 = vcmask 1045504
        %v562 = vsel %vm560, 4294967295, 65535
        %v563 = vsel %vm561, %v562, 0
        %v565 = vand.u32 %v458, %v563
        %567 = vmatprep.subr.bf16.mxu0 0
        %568 = vmatpush1.bf16.msra.mxu0 %v454
        %569 = vmatprep.subr.bf16.mxu0 0
        %570 = vmatpush1.bf16.msra.mxu0 %v455
        %571 = vmatprep.subr.bf16.mxu0 0
        %572 = vmatpush1.bf16.msra.mxu0 %v456
        %573 = vmatprep.subr.bf16.mxu0 0
        %574 = vmatpush1.bf16.msra.mxu0 %v457
        %575 = vmatprep.subr.bf16.mxu0 0
        %576 = vmatpush1.bf16.msra.mxu0 %v565
        %577 = vmatprep.subr.bf16.mxu0 0
        %578 = vmatpush1.bf16.msra.mxu0 0
        %579 = vmatprep.subr.bf16.mxu0 0
        %580 = vmatpush1.bf16.msra.mxu0 0
        %581 = vmatprep.subr.bf16.mxu0 0
        %582 = vmatpush1.bf16.msra.mxu0 0
        %583 = vmatprep.subr.bf16.mxu0 0
        %584 = vmatpush1.bf16.msra.mxu0 0
        %585 = vmatprep.subr.bf16.mxu0 0
        %586 = vmatpush1.bf16.msra.mxu0 0
        %587 = vmatprep.subr.bf16.mxu0 0
        %588 = vmatpush1.bf16.msra.mxu0 0
        %589 = vmatprep.subr.bf16.mxu0 0
        %590 = vmatpush1.bf16.msra.mxu0 0
        %591 = vmatprep.subr.bf16.mxu0 0
        %592 = vmatpush1.bf16.msra.mxu0 0
        %593 = vmatprep.subr.bf16.mxu0 0
        %594 = vmatpush1.bf16.msra.mxu0 0
        %595 = vmatprep.subr.bf16.mxu0 0
        %596 = vmatpush1.bf16.msra.mxu0 0
        %597 = vmatprep.subr.bf16.mxu0 0
        %598 = vmatpush1.bf16.msra.mxu0 0
        %599 = vmatprep.mubr.bf16.mxu0 0
        %600 = vmatmul.mubr.bf16.gmra.mrb[0].mxu0 %v465
        %v601 = vpop.f32.mrb[0].mxu0
        %v602 = vadd.f32 %v272, %v601
        %v603 = vpop.f32.mrb[0].mxu0
        %v604 = vpop.f32.mrb[0].mxu0
        %v605 = vadd.f32 %v272, %v604
        %v606 = vpop.f32.mrb[0].mxu0
        %607 = vmatprep.mubr.bf16.mxu0 0
        %608 = vmatmul.mubr.bf16.gmra.mrb[0].mxu0 %v468
        %v609 = vpop.f32.mrb[0].mxu0
        %v610 = vadd.f32 %v272, %v609
        %v611 = vpop.f32.mrb[0].mxu0
        %v612 = vpop.f32.mrb[0].mxu0
        %v613 = vadd.f32 %v272, %v612
        %v614 = vpop.f32.mrb[0].mxu0
        %615 = vmatprep.mubr.bf16.mxu0 0
        %616 = vmatmul.mubr.bf16.gmra.mrb[0].mxu0 %v471
        %v617 = vpop.f32.mrb[0].mxu0
        %v618 = vadd.f32 %v272, %v617
        %v619 = vpop.f32.mrb[0].mxu0
        %v620 = vpop.f32.mrb[0].mxu0
        %v621 = vadd.f32 %v272, %v620
        %v622 = vpop.f32.mrb[0].mxu0
        %623 = vmatprep.mubr.bf16.mxu0 0
        %624 = vmatmul.mubr.bf16.gmra.mrb[0].mxu0 %v474
        %v625 = vpop.f32.mrb[0].mxu0
        %v626 = vadd.f32 %v272, %v625
        %v627 = vpop.f32.mrb[0].mxu0
        %v628 = vpop.f32.mrb[0].mxu0
        %v629 = vadd.f32 %v272, %v628
        %v630 = vpop.f32.mrb[0].mxu0
        %631 = vmatprep.mubr.bf16.mxu0 0
        %632 = vmatmul.mubr.bf16.gmra.mrb[0].mxu0 %v477
        %v633 = vpop.f32.mrb[0].mxu0
        %v634 = vadd.f32 %v272, %v633
        %v635 = vpop.f32.mrb[0].mxu0
        %v636 = vpop.f32.mrb[0].mxu0
        %v637 = vadd.f32 %v272, %v636
        %v638 = vpop.f32.mrb[0].mxu0
        %639 = vmatprep.mubr.bf16.mxu0 0
        %640 = vmatmul.mubr.bf16.gmra.mrb[0].mxu0 %v480
        %v641 = vpop.f32.mrb[0].mxu0
        %v642 = vadd.f32 %v272, %v641
        %v643 = vpop.f32.mrb[0].mxu0
        %v644 = vpop.f32.mrb[0].mxu0
        %v645 = vadd.f32 %v272, %v644
        %v646 = vpop.f32.mrb[0].mxu0
        %647 = vmatprep.mubr.bf16.mxu0 0
        %648 = vmatmul.mubr.bf16.gmra.mrb[0].mxu0 %v483
        %v649 = vpop.f32.mrb[0].mxu0
        %v650 = vadd.f32 %v272, %v649
        %v651 = vpop.f32.mrb[0].mxu0
        %v652 = vpop.f32.mrb[0].mxu0
        %v653 = vadd.f32 %v272, %v652
        %v654 = vpop.f32.mrb[0].mxu0
        %655 = vmatprep.mubr.bf16.mxu0 0
        %656 = vmatmul.mubr.bf16.gmra.mrb[0].mxu0 %v486
        %v657 = vpop.f32.mrb[0].mxu0
        %v658 = vadd.f32 %v272, %v657
        %v659 = vpop.f32.mrb[0].mxu0
        %v660 = vpop.f32.mrb[0].mxu0
        %v661 = vadd.f32 %v272, %v660
        %v662 = vpop.f32.mrb[0].mxu0
        %663 = vmatprep.mubr.bf16.mxu0 0
        %664 = vmatmul.mubr.bf16.gmra.mrb[0].mxu0 %v489
        %v665 = vpop.f32.mrb[0].mxu0
        %v666 = vadd.f32 %v272, %v665
        %v667 = vpop.f32.mrb[0].mxu0
        %v668 = vpop.f32.mrb[0].mxu0
        %v669 = vadd.f32 %v272, %v668
        %v670 = vpop.f32.mrb[0].mxu0
        %671 = vmatprep.mubr.bf16.mxu0 0
        %672 = vmatmul.mubr.bf16.gmra.mrb[0].mxu0 %v492
        %v673 = vpop.f32.mrb[0].mxu0
        %v674 = vadd.f32 %v272, %v673
        %v675 = vpop.f32.mrb[0].mxu0
        %v676 = vpop.f32.mrb[0].mxu0
        %v677 = vadd.f32 %v272, %v676
        %v678 = vpop.f32.mrb[0].mxu0
        %679 = vmatprep.mubr.bf16.mxu0 0
        %680 = vmatmul.mubr.bf16.gmra.mrb[0].mxu0 %v495
        %v681 = vpop.f32.mrb[0].mxu0
        %v682 = vadd.f32 %v272, %v681
        %v683 = vpop.f32.mrb[0].mxu0
        %v684 = vpop.f32.mrb[0].mxu0
        %v685 = vadd.f32 %v272, %v684
        %v686 = vpop.f32.mrb[0].mxu0
        %687 = vmatprep.mubr.bf16.mxu0 0
        %688 = vmatmul.mubr.bf16.gmra.mrb[0].mxu0 %v498
        %v689 = vpop.f32.mrb[0].mxu0
        %v690 = vadd.f32 %v272, %v689
        %v691 = vpop.f32.mrb[0].mxu0
        %v692 = vpop.f32.mrb[0].mxu0
        %v693 = vadd.f32 %v272, %v692
        %v694 = vpop.f32.mrb[0].mxu0
        %695 = vmatprep.mubr.bf16.mxu0 0
        %696 = vmatmul.mubr.bf16.gmra.mrb[0].mxu0 %v501
        %v697 = vpop.f32.mrb[0].mxu0
        %v698 = vadd.f32 %v272, %v697
        %v699 = vpop.f32.mrb[0].mxu0
        %v700 = vpop.f32.mrb[0].mxu0
        %v701 = vadd.f32 %v272, %v700
        %v702 = vpop.f32.mrb[0].mxu0
        %703 = vmatprep.mubr.bf16.mxu0 0
        %704 = vmatmul.mubr.bf16.gmra.mrb[0].mxu0 %v504
        %v705 = vpop.f32.mrb[0].mxu0
        %v706 = vadd.f32 %v272, %v705
        %v707 = vpop.f32.mrb[0].mxu0
        %v708 = vpop.f32.mrb[0].mxu0
        %v709 = vadd.f32 %v272, %v708
        %v710 = vpop.f32.mrb[0].mxu0
        %711 = vmatprep.mubr.bf16.mxu0 0
        %712 = vmatmul.mubr.bf16.gmra.mrb[0].mxu0 %v507
        %v713 = vpop.f32.mrb[0].mxu0
        %v714 = vadd.f32 %v272, %v713
        %v715 = vpop.f32.mrb[0].mxu0
        %v716 = vpop.f32.mrb[0].mxu0
        %v717 = vadd.f32 %v272, %v716
        %v718 = vpop.f32.mrb[0].mxu0
        %719 = vmatprep.mubr.bf16.mxu0 0
        %720 = vmatmul.mubr.bf16.gmra.mrb[0].mxu0 %v510
        %v721 = vpop.f32.mrb[0].mxu0
        %v722 = vadd.f32 %v272, %v721
        %v723 = vpop.f32.mrb[0].mxu0
        %v724 = vpop.f32.mrb[0].mxu0
        %v725 = vadd.f32 %v272, %v724
        %v726 = vpop.f32.mrb[0].mxu0
        %727 = vmatprep.mubr.bf16.mxu0 0
        %728 = vmatmul.mubr.bf16.gmra.mrb[0].mxu0 %v513
        %v729 = vpop.f32.mrb[0].mxu0
        %v730 = vadd.f32 %v272, %v729
        %v731 = vpop.f32.mrb[0].mxu0
        %v732 = vpop.f32.mrb[0].mxu0
        %v733 = vadd.f32 %v272, %v732
        %v734 = vpop.f32.mrb[0].mxu0
        %735 = vmatprep.mubr.bf16.mxu0 0
        %736 = vmatmul.mubr.bf16.gmra.mrb[0].mxu0 %v516
        %v737 = vpop.f32.mrb[0].mxu0
        %v738 = vadd.f32 %v272, %v737
        %v739 = vpop.f32.mrb[0].mxu0
        %v740 = vpop.f32.mrb[0].mxu0
        %v741 = vadd.f32 %v272, %v740
        %v742 = vpop.f32.mrb[0].mxu0
        %743 = vmatprep.mubr.bf16.mxu0 0
        %744 = vmatmul.mubr.bf16.gmra.mrb[0].mxu0 %v519
        %v745 = vpop.f32.mrb[0].mxu0
        %v746 = vadd.f32 %v272, %v745
        %v747 = vpop.f32.mrb[0].mxu0
        %v748 = vpop.f32.mrb[0].mxu0
        %v749 = vadd.f32 %v272, %v748
        %v750 = vpop.f32.mrb[0].mxu0
        %751 = vmatprep.mubr.bf16.mxu0 0
        %752 = vmatmul.mubr.bf16.gmra.mrb[0].mxu0 %v522
        %v753 = vpop.f32.mrb[0].mxu0
        %v754 = vadd.f32 %v272, %v753
        %v755 = vpop.f32.mrb[0].mxu0
        %v756 = vpop.f32.mrb[0].mxu0
        %v757 = vadd.f32 %v272, %v756
        %v758 = vpop.f32.mrb[0].mxu0
        %759 = vmatprep.mubr.bf16.mxu0 0
        %760 = vmatmul.mubr.bf16.gmra.mrb[0].mxu0 %v525
        %v761 = vpop.f32.mrb[0].mxu0
        %v762 = vadd.f32 %v272, %v761
        %v763 = vpop.f32.mrb[0].mxu0
        %v764 = vpop.f32.mrb[0].mxu0
        %v765 = vadd.f32 %v272, %v764
        %v766 = vpop.f32.mrb[0].mxu0
        %767 = vmatprep.mubr.bf16.mxu0 0
        %768 = vmatmul.mubr.bf16.gmra.mrb[0].mxu0 %v528
        %v769 = vpop.f32.mrb[0].mxu0
        %v770 = vadd.f32 %v272, %v769
        %v771 = vpop.f32.mrb[0].mxu0
        %v772 = vpop.f32.mrb[0].mxu0
        %v773 = vadd.f32 %v272, %v772
        %v774 = vpop.f32.mrb[0].mxu0
        %775 = vmatprep.mubr.bf16.mxu0 0
        %776 = vmatmul.mubr.bf16.gmra.mrb[0].mxu0 %v531
        %v777 = vpop.f32.mrb[0].mxu0
        %v778 = vadd.f32 %v272, %v777
        %v779 = vpop.f32.mrb[0].mxu0
        %v780 = vpop.f32.mrb[0].mxu0
        %v781 = vadd.f32 %v272, %v780
        %v782 = vpop.f32.mrb[0].mxu0
        %783 = vmatprep.mubr.bf16.mxu0 0
        %784 = vmatmul.mubr.bf16.gmra.mrb[0].mxu0 %v534
        %v785 = vpop.f32.mrb[0].mxu0
        %v786 = vadd.f32 %v272, %v785
        %v787 = vpop.f32.mrb[0].mxu0
        %v788 = vpop.f32.mrb[0].mxu0
        %v789 = vadd.f32 %v272, %v788
        %v790 = vpop.f32.mrb[0].mxu0
        %791 = vmatprep.mubr.bf16.mxu0 0
        %792 = vmatmul.mubr.bf16.gmra.mrb[0].mxu0 %v537
        %v793 = vpop.f32.mrb[0].mxu0
        %v794 = vadd.f32 %v272, %v793
        %v795 = vpop.f32.mrb[0].mxu0
        %v796 = vpop.f32.mrb[0].mxu0
        %v797 = vadd.f32 %v272, %v796
        %v798 = vpop.f32.mrb[0].mxu0
        %799 = vmatprep.mubr.bf16.mxu0 0
        %800 = vmatmul.mubr.bf16.gmra.mrb[0].mxu0 %v540
        %v801 = vpop.f32.mrb[0].mxu0
        %v802 = vadd.f32 %v272, %v801
        %v803 = vpop.f32.mrb[0].mxu0
        %v804 = vpop.f32.mrb[0].mxu0
        %v805 = vadd.f32 %v272, %v804
        %v806 = vpop.f32.mrb[0].mxu0
        %807 = vmatprep.mubr.bf16.mxu0 0
        %808 = vmatmul.mubr.bf16.gmra.mrb[0].mxu0 %v543
        %v809 = vpop.f32.mrb[0].mxu0
        %v810 = vadd.f32 %v272, %v809
        %v811 = vpop.f32.mrb[0].mxu0
        %v812 = vpop.f32.mrb[0].mxu0
        %v813 = vadd.f32 %v272, %v812
        %v814 = vpop.f32.mrb[0].mxu0
        %815 = vmatprep.mubr.bf16.mxu0 0
        %816 = vmatmul.mubr.bf16.gmra.mrb[0].mxu0 %v546
        %v817 = vpop.f32.mrb[0].mxu0
        %v818 = vadd.f32 %v272, %v817
        %v819 = vpop.f32.mrb[0].mxu0
        %v820 = vpop.f32.mrb[0].mxu0
        %v821 = vadd.f32 %v272, %v820
        %v822 = vpop.f32.mrb[0].mxu0
        %823 = vmatprep.mubr.bf16.mxu0 0
        %824 = vmatmul.mubr.bf16.gmra.mrb[0].mxu0 %v549
        %v825 = vpop.f32.mrb[0].mxu0
        %v826 = vadd.f32 %v272, %v825
        %v827 = vpop.f32.mrb[0].mxu0
        %v828 = vpop.f32.mrb[0].mxu0
        %v829 = vadd.f32 %v272, %v828
        %v830 = vpop.f32.mrb[0].mxu0
        %831 = vmatprep.mubr.bf16.mxu0 0
        %832 = vmatmul.mubr.bf16.gmra.mrb[0].mxu0 %v552
        %v833 = vpop.f32.mrb[0].mxu0
        %v834 = vadd.f32 %v272, %v833
        %v835 = vpop.f32.mrb[0].mxu0
        %v836 = vpop.f32.mrb[0].mxu0
        %v837 = vadd.f32 %v272, %v836
        %v838 = vpop.f32.mrb[0].mxu0
        %839 = vmatprep.mubr.bf16.mxu0 0
        %840 = vmatmul.mubr.bf16.gmra.mrb[0].mxu0 %v555
        %v841 = vpop.f32.mrb[0].mxu0
        %v842 = vadd.f32 %v272, %v841
        %v843 = vpop.f32.mrb[0].mxu0
        %v844 = vpop.f32.mrb[0].mxu0
        %v845 = vadd.f32 %v272, %v844
        %v846 = vpop.f32.mrb[0].mxu0
        %847 = vmatprep.mubr.bf16.mxu0 0
        %848 = vmatmul.mubr.bf16.gmra.mrb[0].mxu0 %v558
        %v849 = vpop.f32.mrb[0].mxu0
        %v850 = vadd.f32 %v272, %v849
        %v851 = vpop.f32.mrb[0].mxu0
        %v852 = vpop.f32.mrb[0].mxu0
        %v853 = vadd.f32 %v272, %v852
        %v854 = vpop.f32.mrb[0].mxu0
        %855 = vdwg.mxu0
        %v856 = vmax.f32 %v602, 0.0
        %v857 = vmax.f32 %v605, 0.0
        %v858 = vmax.f32 %v610, 0.0
        %v859 = vmax.f32 %v613, 0.0
        %v860 = vmax.f32 %v618, 0.0
        %v861 = vmax.f32 %v621, 0.0
        %v862 = vmax.f32 %v626, 0.0
        %v863 = vmax.f32 %v629, 0.0
        %v864 = vmax.f32 %v634, 0.0
        %v865 = vmax.f32 %v637, 0.0
        %v866 = vmax.f32 %v642, 0.0
        %v867 = vmax.f32 %v645, 0.0
        %v868 = vmax.f32 %v650, 0.0
        %v869 = vmax.f32 %v653, 0.0
        %v870 = vmax.f32 %v658, 0.0
        %v871 = vmax.f32 %v661, 0.0
        %v872 = vmax.f32 %v666, 0.0
        %v873 = vmax.f32 %v669, 0.0
        %v874 = vmax.f32 %v674, 0.0
        %v875 = vmax.f32 %v677, 0.0
        %v876 = vmax.f32 %v682, 0.0
        %v877 = vmax.f32 %v685, 0.0
        %v878 = vmax.f32 %v690, 0.0
        %v879 = vmax.f32 %v693, 0.0
        %v880 = vmax.f32 %v698, 0.0
        %v881 = vmax.f32 %v701, 0.0
        %v882 = vmax.f32 %v706, 0.0
        %v883 = vmax.f32 %v709, 0.0
        %v884 = vmax.f32 %v714, 0.0
        %v885 = vmax.f32 %v717, 0.0
        %v886 = vmax.f32 %v722, 0.0
        %v887 = vmax.f32 %v725, 0.0
        %v888 = vmax.f32 %v730, 0.0
        %v889 = vmax.f32 %v733, 0.0
        %v890 = vmax.f32 %v738, 0.0
        %v891 = vmax.f32 %v741, 0.0
        %v892 = vmax.f32 %v746, 0.0
        %v893 = vmax.f32 %v749, 0.0
        %v894 = vmax.f32 %v754, 0.0
        %v895 = vmax.f32 %v757, 0.0
        %v896 = vmax.f32 %v762, 0.0
        %v897 = vmax.f32 %v765, 0.0
        %v898 = vmax.f32 %v770, 0.0
        %v899 = vmax.f32 %v773, 0.0
        %v900 = vmax.f32 %v778, 0.0
        %v901 = vmax.f32 %v781, 0.0
        %v902 = vmax.f32 %v786, 0.0
        %v903 = vmax.f32 %v789, 0.0
        %v904 = vmax.f32 %v794, 0.0
        %v905 = vmax.f32 %v797, 0.0
        %v906 = vmax.f32 %v802, 0.0
        %v907 = vmax.f32 %v805, 0.0
        %v908 = vmax.f32 %v810, 0.0
        %v909 = vmax.f32 %v813, 0.0
        %v910 = vmax.f32 %v818, 0.0
        %v911 = vmax.f32 %v821, 0.0
        %v912 = vmax.f32 %v826, 0.0
        %v913 = vmax.f32 %v829, 0.0
        %v914 = vmax.f32 %v834, 0.0
        %v915 = vmax.f32 %v837, 0.0
        %v916 = vmax.f32 %v842, 0.0
        %v917 = vmax.f32 %v845, 0.0
        %v918 = vmax.f32 %v850, 0.0
        %v919 = vmax.f32 %v853, 0.0
        %vm920 = vcmask 48128
        %921 = vst.msk [vmem:[%s172] sm:$0xff] %vm920, %v856
        %922 = vst.msk [vmem:[%s172 + $0x8] sm:$0xff] %vm920, %v857
        %923 = vst.msk [vmem:[%s172 + $0x10] sm:$0xff] %vm920, %v858
        %924 = vst.msk [vmem:[%s172 + $0x18] sm:$0xff] %vm920, %v859
        %925 = vst.msk [vmem:[%s172 + $0x20] sm:$0xff] %vm920, %v860
        %926 = vst.msk [vmem:[%s172 + $0x28] sm:$0xff] %vm920, %v861
        %927 = vst.msk [vmem:[%s172 + $0x30] sm:$0xff] %vm920, %v862
        %928 = vst.msk [vmem:[%s172 + $0x38] sm:$0xff] %vm920, %v863
        %929 = vst.msk [vmem:[%s172 + $0x40] sm:$0xff] %vm920, %v864
        %930 = vst.msk [vmem:[%s172 + $0x48] sm:$0xff] %vm920, %v865
        %931 = vst.msk [vmem:[%s172 + $0x50] sm:$0xff] %vm920, %v866
        %932 = vst.msk [vmem:[%s172 + $0x58] sm:$0xff] %vm920, %v867
        %933 = vst.msk [vmem:[%s172 + $0x60] sm:$0xff] %vm920, %v868
        %934 = vst.msk [vmem:[%s172 + $0x68] sm:$0xff] %vm920, %v869
        %935 = vst.msk [vmem:[%s172 + $0x70] sm:$0xff] %vm920, %v870
        %936 = vst.msk [vmem:[%s172 + $0x78] sm:$0xff] %vm920, %v871
        %937 = vst.msk [vmem:[%s172 + $0x80] sm:$0xff] %vm920, %v872
        %938 = vst.msk [vmem:[%s172 + $0x88] sm:$0xff] %vm920, %v873
        %939 = vst.msk [vmem:[%s172 + $0x90] sm:$0xff] %vm920, %v874
        %940 = vst.msk [vmem:[%s172 + $0x98] sm:$0xff] %vm920, %v875
        %941 = vst.msk [vmem:[%s172 + $0xa0] sm:$0xff] %vm920, %v876
        %942 = vst.msk [vmem:[%s172 + $0xa8] sm:$0xff] %vm920, %v877
        %943 = vst.msk [vmem:[%s172 + $0xb0] sm:$0xff] %vm920, %v878
        %944 = vst.msk [vmem:[%s172 + $0xb8] sm:$0xff] %vm920, %v879
        %945 = vst.msk [vmem:[%s172 + $0xc0] sm:$0xff] %vm920, %v880
        %946 = vst.msk [vmem:[%s172 + $0xc8] sm:$0xff] %vm920, %v881
        %947 = vst.msk [vmem:[%s172 + $0xd0] sm:$0xff] %vm920, %v882
        %948 = vst.msk [vmem:[%s172 + $0xd8] sm:$0xff] %vm920, %v883
        %949 = vst.msk [vmem:[%s172 + $0xe0] sm:$0xff] %vm920, %v884
        %950 = vst.msk [vmem:[%s172 + $0xe8] sm:$0xff] %vm920, %v885
        %951 = vst.msk [vmem:[%s172 + $0xf0] sm:$0xff] %vm920, %v886
        %952 = vst.msk [vmem:[%s172 + $0xf8] sm:$0xff] %vm920, %v887
        %953 = vst.msk [vmem:[%s172 + $0x100] sm:$0xff] %vm920, %v888
        %954 = vst.msk [vmem:[%s172 + $0x108] sm:$0xff] %vm920, %v889
        %955 = vst.msk [vmem:[%s172 + $0x110] sm:$0xff] %vm920, %v890
        %956 = vst.msk [vmem:[%s172 + $0x118] sm:$0xff] %vm920, %v891
        %957 = vst.msk [vmem:[%s172 + $0x120] sm:$0xff] %vm920, %v892
        %958 = vst.msk [vmem:[%s172 + $0x128] sm:$0xff] %vm920, %v893
        %959 = vst.msk [vmem:[%s172 + $0x130] sm:$0xff] %vm920, %v894
        %960 = vst.msk [vmem:[%s172 + $0x138] sm:$0xff] %vm920, %v895
        %961 = vst.msk [vmem:[%s172 + $0x140] sm:$0xff] %vm920, %v896
        %962 = vst.msk [vmem:[%s172 + $0x148] sm:$0xff] %vm920, %v897
        %963 = vst.msk [vmem:[%s172 + $0x150] sm:$0xff] %vm920, %v898
        %964 = vst.msk [vmem:[%s172 + $0x158] sm:$0xff] %vm920, %v899
        %965 = vst.msk [vmem:[%s172 + $0x160] sm:$0xff] %vm920, %v900
        %966 = vst.msk [vmem:[%s172 + $0x168] sm:$0xff] %vm920, %v901
        %967 = vst.msk [vmem:[%s172 + $0x170] sm:$0xff] %vm920, %v902
        %968 = vst.msk [vmem:[%s172 + $0x178] sm:$0xff] %vm920, %v903
        %969 = vst.msk [vmem:[%s172 + $0x180] sm:$0xff] %vm920, %v904
        %970 = vst.msk [vmem:[%s172 + $0x188] sm:$0xff] %vm920, %v905
        %971 = vst.msk [vmem:[%s172 + $0x190] sm:$0xff] %vm920, %v906
        %972 = vst.msk [vmem:[%s172 + $0x198] sm:$0xff] %vm920, %v907
        %973 = vst.msk [vmem:[%s172 + $0x1a0] sm:$0xff] %vm920, %v908
        %974 = vst.msk [vmem:[%s172 + $0x1a8] sm:$0xff] %vm920, %v909
        %975 = vst.msk [vmem:[%s172 + $0x1b0] sm:$0xff] %vm920, %v910
        %976 = vst.msk [vmem:[%s172 + $0x1b8] sm:$0xff] %vm920, %v911
        %977 = vst.msk [vmem:[%s172 + $0x1c0] sm:$0xff] %vm920, %v912
        %978 = vst.msk [vmem:[%s172 + $0x1c8] sm:$0xff] %vm920, %v913
        %979 = vst.msk [vmem:[%s172 + $0x1d0] sm:$0xff] %vm920, %v914
        %980 = vst.msk [vmem:[%s172 + $0x1d8] sm:$0xff] %vm920, %v915
        %981 = vst.msk [vmem:[%s172 + $0x1e0] sm:$0xff] %vm920, %v916
        %982 = vst.msk [vmem:[%s172 + $0x1e8] sm:$0xff] %vm920, %v917
        %983 = vst.msk [vmem:[%s172 + $0x1f0] sm:$0xff] %vm920, %v918
        %984 = vst.msk [vmem:[%s172 + $0x1f8] sm:$0xff] %vm920, %v919
        %s985 = sand.u32 %s90, 1
        %s986 = sand.u32 %s90, 1
        %s987 = smul.addr %s986, 512
        %s988 = scalar_lea.vmem [#allocation2], %s987
        // Predicated region
        $region33: #{cnn_forward.4} parent=31 // pred_check
          %p989 = pneg %p100
        $region34: #{cnn_forward.4} parent=31 // pred_check_branch
          %991 = sbr.rel (%p989) target = $region36
        $region35: #{cnn_forward.4} parent=31 // pred_region
          %s992 = smul.u32 64, %s14
          %s993 = ssub.s32 196, %s992
          %p994 = scmp.lt.s32.totalorder %s993, 64
          %s995 = scalar_select %p994, %s993, 64
          %s996 = smul.u32 128, %s995
          %p997 = scmp.ne.s32.totalorder 0, %s996
          %s998 = smul.addr %s992, 8
          %s999 = scalar_lea.vmem %s3, %s998
          // Predicated region
          $region37: #{cnn_forward.4} parent=35 // pred_check
            %p1000 = pneg %p997
          $region38: #{cnn_forward.4} parent=35 // pred_check_branch
            %1002 = sbr.rel (%p1000) target = $region40
          $region39: #{cnn_forward.4} parent=35 // pred_region
            // Predicated region
            $region41: #{cnn_forward.4} parent=39 // pred_check
              _
            $region42: #{cnn_forward.4} parent=39 // pred_check_branch
              %1004 = sbr.rel (0) target = $region44
            $region43: #{cnn_forward.4} parent=39 // pred_region
              // Predicated region
              $region63: #{cnn_forward.4} parent=43 // pred_check
                _
              $region64: #{cnn_forward.4} parent=43 // pred_check_branch
                %1179 = sbr.rel (0) target = $region66
              $region65: #{cnn_forward.4} parent=43 // pred_region
                %s1180 = sshrl.u32 %s995, 6
                // While loop
                $region67: #{cnn_forward.4} parent=65 // loop_pre_header
                  _
                $region68: #{cnn_forward.4} parent=65 // loop_header
                  %s1182 = sphi 0, %s1184
                  %p1183 = scmp.ge.s32.totalorder %s1182, %s1180
                  %s1187 = sphi 0, %s1320
                  %s1188 = sphi %s988, %s1323
                  %s1189 = sphi %s999, %s1324
                $region69: #{cnn_forward.4} parent=65 // loop_header_branch
                  %1186 = sbr.rel (%p1183) target = $region73
                $region70: #{cnn_forward.4} parent=65 // loop_body
                  %v1190 = vld [vmem:[%s1188] sm:$0xff]
                  %1191 = vst [vmem:[%s1189] sm:$0xff] %v1190
                  %v1192 = vld [vmem:[%s1188 + $0x8] sm:$0xff]
                  %1193 = vst [vmem:[%s1189 + $0x8] sm:$0xff] %v1192
                  %v1194 = vld [vmem:[%s1188 + $0x10] sm:$0xff]
                  %1195 = vst [vmem:[%s1189 + $0x10] sm:$0xff] %v1194
                  %v1196 = vld [vmem:[%s1188 + $0x18] sm:$0xff]
                  %1197 = vst [vmem:[%s1189 + $0x18] sm:$0xff] %v1196
                  %v1198 = vld [vmem:[%s1188 + $0x20] sm:$0xff]
                  %1199 = vst [vmem:[%s1189 + $0x20] sm:$0xff] %v1198
                  %v1200 = vld [vmem:[%s1188 + $0x28] sm:$0xff]
                  %1201 = vst [vmem:[%s1189 + $0x28] sm:$0xff] %v1200
                  %v1202 = vld [vmem:[%s1188 + $0x30] sm:$0xff]
                  %1203 = vst [vmem:[%s1189 + $0x30] sm:$0xff] %v1202
                  %v1204 = vld [vmem:[%s1188 + $0x38] sm:$0xff]
                  %1205 = vst [vmem:[%s1189 + $0x38] sm:$0xff] %v1204
                  %v1206 = vld [vmem:[%s1188 + $0x40] sm:$0xff]
                  %1207 = vst [vmem:[%s1189 + $0x40] sm:$0xff] %v1206
                  %v1208 = vld [vmem:[%s1188 + $0x48] sm:$0xff]
                  %1209 = vst [vmem:[%s1189 + $0x48] sm:$0xff] %v1208
                  %v1210 = vld [vmem:[%s1188 + $0x50] sm:$0xff]
                  %1211 = vst [vmem:[%s1189 + $0x50] sm:$0xff] %v1210
                  %v1212 = vld [vmem:[%s1188 + $0x58] sm:$0xff]
                  %1213 = vst [vmem:[%s1189 + $0x58] sm:$0xff] %v1212
                  %v1214 = vld [vmem:[%s1188 + $0x60] sm:$0xff]
                  %1215 = vst [vmem:[%s1189 + $0x60] sm:$0xff] %v1214
                  %v1216 = vld [vmem:[%s1188 + $0x68] sm:$0xff]
                  %1217 = vst [vmem:[%s1189 + $0x68] sm:$0xff] %v1216
                  %v1218 = vld [vmem:[%s1188 + $0x70] sm:$0xff]
                  %1219 = vst [vmem:[%s1189 + $0x70] sm:$0xff] %v1218
                  %v1220 = vld [vmem:[%s1188 + $0x78] sm:$0xff]
                  %1221 = vst [vmem:[%s1189 + $0x78] sm:$0xff] %v1220
                  %v1222 = vld [vmem:[%s1188 + $0x80] sm:$0xff]
                  %1223 = vst [vmem:[%s1189 + $0x80] sm:$0xff] %v1222
                  %v1224 = vld [vmem:[%s1188 + $0x88] sm:$0xff]
                  %1225 = vst [vmem:[%s1189 + $0x88] sm:$0xff] %v1224
                  %v1226 = vld [vmem:[%s1188 + $0x90] sm:$0xff]
                  %1227 = vst [vmem:[%s1189 + $0x90] sm:$0xff] %v1226
                  %v1228 = vld [vmem:[%s1188 + $0x98] sm:$0xff]
                  %1229 = vst [vmem:[%s1189 + $0x98] sm:$0xff] %v1228
                  %v1230 = vld [vmem:[%s1188 + $0xa0] sm:$0xff]
                  %1231 = vst [vmem:[%s1189 + $0xa0] sm:$0xff] %v1230
                  %v1232 = vld [vmem:[%s1188 + $0xa8] sm:$0xff]
                  %1233 = vst [vmem:[%s1189 + $0xa8] sm:$0xff] %v1232
                  %v1234 = vld [vmem:[%s1188 + $0xb0] sm:$0xff]
                  %1235 = vst [vmem:[%s1189 + $0xb0] sm:$0xff] %v1234
                  %v1236 = vld [vmem:[%s1188 + $0xb8] sm:$0xff]
                  %1237 = vst [vmem:[%s1189 + $0xb8] sm:$0xff] %v1236
                  %v1238 = vld [vmem:[%s1188 + $0xc0] sm:$0xff]
                  %1239 = vst [vmem:[%s1189 + $0xc0] sm:$0xff] %v1238
                  %v1240 = vld [vmem:[%s1188 + $0xc8] sm:$0xff]
                  %1241 = vst [vmem:[%s1189 + $0xc8] sm:$0xff] %v1240
                  %v1242 = vld [vmem:[%s1188 + $0xd0] sm:$0xff]
                  %1243 = vst [vmem:[%s1189 + $0xd0] sm:$0xff] %v1242
                  %v1244 = vld [vmem:[%s1188 + $0xd8] sm:$0xff]
                  %1245 = vst [vmem:[%s1189 + $0xd8] sm:$0xff] %v1244
                  %v1246 = vld [vmem:[%s1188 + $0xe0] sm:$0xff]
                  %1247 = vst [vmem:[%s1189 + $0xe0] sm:$0xff] %v1246
                  %v1248 = vld [vmem:[%s1188 + $0xe8] sm:$0xff]
                  %1249 = vst [vmem:[%s1189 + $0xe8] sm:$0xff] %v1248
                  %v1250 = vld [vmem:[%s1188 + $0xf0] sm:$0xff]
                  %1251 = vst [vmem:[%s1189 + $0xf0] sm:$0xff] %v1250
                  %v1252 = vld [vmem:[%s1188 + $0xf8] sm:$0xff]
                  %1253 = vst [vmem:[%s1189 + $0xf8] sm:$0xff] %v1252
                  %v1254 = vld [vmem:[%s1188 + $0x100] sm:$0xff]
                  %1255 = vst [vmem:[%s1189 + $0x100] sm:$0xff] %v1254
                  %v1256 = vld [vmem:[%s1188 + $0x108] sm:$0xff]
                  %1257 = vst [vmem:[%s1189 + $0x108] sm:$0xff] %v1256
                  %v1258 = vld [vmem:[%s1188 + $0x110] sm:$0xff]
                  %1259 = vst [vmem:[%s1189 + $0x110] sm:$0xff] %v1258
                  %v1260 = vld [vmem:[%s1188 + $0x118] sm:$0xff]
                  %1261 = vst [vmem:[%s1189 + $0x118] sm:$0xff] %v1260
                  %v1262 = vld [vmem:[%s1188 + $0x120] sm:$0xff]
                  %1263 = vst [vmem:[%s1189 + $0x120] sm:$0xff] %v1262
                  %v1264 = vld [vmem:[%s1188 + $0x128] sm:$0xff]
                  %1265 = vst [vmem:[%s1189 + $0x128] sm:$0xff] %v1264
                  %v1266 = vld [vmem:[%s1188 + $0x130] sm:$0xff]
                  %1267 = vst [vmem:[%s1189 + $0x130] sm:$0xff] %v1266
                  %v1268 = vld [vmem:[%s1188 + $0x138] sm:$0xff]
                  %1269 = vst [vmem:[%s1189 + $0x138] sm:$0xff] %v1268
                  %v1270 = vld [vmem:[%s1188 + $0x140] sm:$0xff]
                  %1271 = vst [vmem:[%s1189 + $0x140] sm:$0xff] %v1270
                  %v1272 = vld [vmem:[%s1188 + $0x148] sm:$0xff]
                  %1273 = vst [vmem:[%s1189 + $0x148] sm:$0xff] %v1272
                  %v1274 = vld [vmem:[%s1188 + $0x150] sm:$0xff]
                  %1275 = vst [vmem:[%s1189 + $0x150] sm:$0xff] %v1274
                  %v1276 = vld [vmem:[%s1188 + $0x158] sm:$0xff]
                  %1277 = vst [vmem:[%s1189 + $0x158] sm:$0xff] %v1276
                  %v1278 = vld [vmem:[%s1188 + $0x160] sm:$0xff]
                  %1279 = vst [vmem:[%s1189 + $0x160] sm:$0xff] %v1278
                  %v1280 = vld [vmem:[%s1188 + $0x168] sm:$0xff]
                  %1281 = vst [vmem:[%s1189 + $0x168] sm:$0xff] %v1280
                  %v1282 = vld [vmem:[%s1188 + $0x170] sm:$0xff]
                  %1283 = vst [vmem:[%s1189 + $0x170] sm:$0xff] %v1282
                  %v1284 = vld [vmem:[%s1188 + $0x178] sm:$0xff]
                  %1285 = vst [vmem:[%s1189 + $0x178] sm:$0xff] %v1284
                  %v1286 = vld [vmem:[%s1188 + $0x180] sm:$0xff]
                  %1287 = vst [vmem:[%s1189 + $0x180] sm:$0xff] %v1286
                  %v1288 = vld [vmem:[%s1188 + $0x188] sm:$0xff]
                  %1289 = vst [vmem:[%s1189 + $0x188] sm:$0xff] %v1288
                  %v1290 = vld [vmem:[%s1188 + $0x190] sm:$0xff]
                  %1291 = vst [vmem:[%s1189 + $0x190] sm:$0xff] %v1290
                  %v1292 = vld [vmem:[%s1188 + $0x198] sm:$0xff]
                  %1293 = vst [vmem:[%s1189 + $0x198] sm:$0xff] %v1292
                  %v1294 = vld [vmem:[%s1188 + $0x1a0] sm:$0xff]
                  %1295 = vst [vmem:[%s1189 + $0x1a0] sm:$0xff] %v1294
                  %v1296 = vld [vmem:[%s1188 + $0x1a8] sm:$0xff]
                  %1297 = vst [vmem:[%s1189 + $0x1a8] sm:$0xff] %v1296
                  %v1298 = vld [vmem:[%s1188 + $0x1b0] sm:$0xff]
                  %1299 = vst [vmem:[%s1189 + $0x1b0] sm:$0xff] %v1298
                  %v1300 = vld [vmem:[%s1188 + $0x1b8] sm:$0xff]
                  %1301 = vst [vmem:[%s1189 + $0x1b8] sm:$0xff] %v1300
                  %v1302 = vld [vmem:[%s1188 + $0x1c0] sm:$0xff]
                  %1303 = vst [vmem:[%s1189 + $0x1c0] sm:$0xff] %v1302
                  %v1304 = vld [vmem:[%s1188 + $0x1c8] sm:$0xff]
                  %1305 = vst [vmem:[%s1189 + $0x1c8] sm:$0xff] %v1304
                  %v1306 = vld [vmem:[%s1188 + $0x1d0] sm:$0xff]
                  %1307 = vst [vmem:[%s1189 + $0x1d0] sm:$0xff] %v1306
                  %v1308 = vld [vmem:[%s1188 + $0x1d8] sm:$0xff]
                  %1309 = vst [vmem:[%s1189 + $0x1d8] sm:$0xff] %v1308
                  %v1310 = vld [vmem:[%s1188 + $0x1e0] sm:$0xff]
                  %1311 = vst [vmem:[%s1189 + $0x1e0] sm:$0xff] %v1310
                  %v1312 = vld [vmem:[%s1188 + $0x1e8] sm:$0xff]
                  %1313 = vst [vmem:[%s1189 + $0x1e8] sm:$0xff] %v1312
                  %v1314 = vld [vmem:[%s1188 + $0x1f0] sm:$0xff]
                  %1315 = vst [vmem:[%s1189 + $0x1f0] sm:$0xff] %v1314
                  %v1316 = vld [vmem:[%s1188 + $0x1f8] sm:$0xff]
                  %1317 = vst [vmem:[%s1189 + $0x1f8] sm:$0xff] %v1316
                  %s1318 = sadd.s32 1, %s1187
                  %p1319 = scmp.ge.s32.totalorder %s1318, %s1180
                  %s1320 = scalar_select %p1319, 0, %s1318
                  %s1321 = smul.u32 %s1320, 512
                  %s1322 = smul.u32 %s1320, 512
                  %s1323 = scalar_lea.vmem %s988, %s1321 [#allocation2]
                  %s1324 = scalar_lea.vmem %s999, %s1322
                $region71: #{cnn_forward.4} parent=65 // loop_footer
                  %s1184 = sadd.s32 %s1182, 1
                $region72: #{cnn_forward.4} parent=65 // loop_footer_branch
                  %1181 = sbr.rel target = $region68
                $region73: #{cnn_forward.4} parent=65 // loop_exit
                  _
                %s1325 = sshrl.u32 %s995, 6
                %s1326 = sand.u32 %s995, 63
                %s1327 = smul.u32 %s1325, 64
                %s1328 = smul.u32 8, %s1327
                %s1329 = scalar_lea.vmem %s988, %s1328 [#allocation2]
                %s1330 = smul.u32 8, %s1327
                %s1331 = scalar_lea.vmem %s999, %s1330
                // While loop
                $region74: #{cnn_forward.4} parent=65 // loop_pre_header
                  _
                $region75: #{cnn_forward.4} parent=65 // loop_header
                  %s1333 = sphi 0, %s1335
                  %p1334 = scmp.ge.s32.totalorder %s1333, %s1326
                  %s1338 = sphi 0, %s1345
                  %s1339 = sphi %s1329, %s1348
                  %s1340 = sphi %s1331, %s1349
                $region76: #{cnn_forward.4} parent=65 // loop_header_branch
                  %1337 = sbr.rel (%p1334) target = $region80
                $region77: #{cnn_forward.4} parent=65 // loop_body
                  %v1341 = vld [vmem:[%s1339] sm:$0xff]
                  %1342 = vst [vmem:[%s1340] sm:$0xff] %v1341
                  %s1343 = sadd.s32 1, %s1338
                  %p1344 = scmp.ge.s32.totalorder %s1343, %s1326
                  %s1345 = scalar_select %p1344, 0, %s1343
                  %s1346 = smul.u32 %s1345, 8
                  %s1347 = smul.u32 %s1345, 8
                  %s1348 = scalar_lea.vmem %s1329, %s1346 [#allocation2]
                  %s1349 = scalar_lea.vmem %s1331, %s1347
                $region78: #{cnn_forward.4} parent=65 // loop_footer
                  %s1335 = sadd.s32 %s1333, 1
                $region79: #{cnn_forward.4} parent=65 // loop_footer_branch
                  %1332 = sbr.rel target = $region75
                $region80: #{cnn_forward.4} parent=65 // loop_exit
                  _
              $region66: #{cnn_forward.4} parent=43 // pred_fallthru
                _
              // Predicated region
              $region81: #{cnn_forward.4} parent=43 // pred_check
                _
              $region82: #{cnn_forward.4} parent=43 // pred_check_branch
                %1351 = sbr.rel target = $region84
              $region83: #{cnn_forward.4} parent=43 // pred_region
                _
              $region84: #{cnn_forward.4} parent=43 // pred_fallthru
                _
            $region44: #{cnn_forward.4} parent=39 // pred_fallthru
              _
            // Predicated region
            $region45: #{cnn_forward.4} parent=39 // pred_check
              _
            $region46: #{cnn_forward.4} parent=39 // pred_check_branch
              %1006 = sbr.rel target = $region48
            $region47: #{cnn_forward.4} parent=39 // pred_region
              %s1008 = sshrl.u32 %s995, 6
              // While loop
              $region49: #{cnn_forward.4} parent=47 // loop_pre_header
                _
              $region50: #{cnn_forward.4} parent=47 // loop_header
                %s1010 = sphi 0, %s1012
                %p1011 = scmp.ge.s32.totalorder %s1010, %s1008
                %s1015 = sphi 0, %s1148
                %s1016 = sphi %s988, %s1151
                %s1017 = sphi %s999, %s1152
              $region51: #{cnn_forward.4} parent=47 // loop_header_branch
                %1014 = sbr.rel (%p1011) target = $region55
              $region52: #{cnn_forward.4} parent=47 // loop_body
                %v1018 = vld [vmem:[%s1016] sm:$0xff]
                %1019 = vst [vmem:[%s1017] sm:$0xff] %v1018
                %v1020 = vld [vmem:[%s1016 + $0x8] sm:$0xff]
                %1021 = vst [vmem:[%s1017 + $0x8] sm:$0xff] %v1020
                %v1022 = vld [vmem:[%s1016 + $0x10] sm:$0xff]
                %1023 = vst [vmem:[%s1017 + $0x10] sm:$0xff] %v1022
                %v1024 = vld [vmem:[%s1016 + $0x18] sm:$0xff]
                %1025 = vst [vmem:[%s1017 + $0x18] sm:$0xff] %v1024
                %v1026 = vld [vmem:[%s1016 + $0x20] sm:$0xff]
                %1027 = vst [vmem:[%s1017 + $0x20] sm:$0xff] %v1026
                %v1028 = vld [vmem:[%s1016 + $0x28] sm:$0xff]
                %1029 = vst [vmem:[%s1017 + $0x28] sm:$0xff] %v1028
                %v1030 = vld [vmem:[%s1016 + $0x30] sm:$0xff]
                %1031 = vst [vmem:[%s1017 + $0x30] sm:$0xff] %v1030
                %v1032 = vld [vmem:[%s1016 + $0x38] sm:$0xff]
                %1033 = vst [vmem:[%s1017 + $0x38] sm:$0xff] %v1032
                %v1034 = vld [vmem:[%s1016 + $0x40] sm:$0xff]
                %1035 = vst [vmem:[%s1017 + $0x40] sm:$0xff] %v1034
                %v1036 = vld [vmem:[%s1016 + $0x48] sm:$0xff]
                %1037 = vst [vmem:[%s1017 + $0x48] sm:$0xff] %v1036
                %v1038 = vld [vmem:[%s1016 + $0x50] sm:$0xff]
                %1039 = vst [vmem:[%s1017 + $0x50] sm:$0xff] %v1038
                %v1040 = vld [vmem:[%s1016 + $0x58] sm:$0xff]
                %1041 = vst [vmem:[%s1017 + $0x58] sm:$0xff] %v1040
                %v1042 = vld [vmem:[%s1016 + $0x60] sm:$0xff]
                %1043 = vst [vmem:[%s1017 + $0x60] sm:$0xff] %v1042
                %v1044 = vld [vmem:[%s1016 + $0x68] sm:$0xff]
                %1045 = vst [vmem:[%s1017 + $0x68] sm:$0xff] %v1044
                %v1046 = vld [vmem:[%s1016 + $0x70] sm:$0xff]
                %1047 = vst [vmem:[%s1017 + $0x70] sm:$0xff] %v1046
                %v1048 = vld [vmem:[%s1016 + $0x78] sm:$0xff]
                %1049 = vst [vmem:[%s1017 + $0x78] sm:$0xff] %v1048
                %v1050 = vld [vmem:[%s1016 + $0x80] sm:$0xff]
                %1051 = vst [vmem:[%s1017 + $0x80] sm:$0xff] %v1050
                %v1052 = vld [vmem:[%s1016 + $0x88] sm:$0xff]
                %1053 = vst [vmem:[%s1017 + $0x88] sm:$0xff] %v1052
                %v1054 = vld [vmem:[%s1016 + $0x90] sm:$0xff]
                %1055 = vst [vmem:[%s1017 + $0x90] sm:$0xff] %v1054
                %v1056 = vld [vmem:[%s1016 + $0x98] sm:$0xff]
                %1057 = vst [vmem:[%s1017 + $0x98] sm:$0xff] %v1056
                %v1058 = vld [vmem:[%s1016 + $0xa0] sm:$0xff]
                %1059 = vst [vmem:[%s1017 + $0xa0] sm:$0xff] %v1058
                %v1060 = vld [vmem:[%s1016 + $0xa8] sm:$0xff]
                %1061 = vst [vmem:[%s1017 + $0xa8] sm:$0xff] %v1060
                %v1062 = vld [vmem:[%s1016 + $0xb0] sm:$0xff]
                %1063 = vst [vmem:[%s1017 + $0xb0] sm:$0xff] %v1062
                %v1064 = vld [vmem:[%s1016 + $0xb8] sm:$0xff]
                %1065 = vst [vmem:[%s1017 + $0xb8] sm:$0xff] %v1064
                %v1066 = vld [vmem:[%s1016 + $0xc0] sm:$0xff]
                %1067 = vst [vmem:[%s1017 + $0xc0] sm:$0xff] %v1066
                %v1068 = vld [vmem:[%s1016 + $0xc8] sm:$0xff]
                %1069 = vst [vmem:[%s1017 + $0xc8] sm:$0xff] %v1068
                %v1070 = vld [vmem:[%s1016 + $0xd0] sm:$0xff]
                %1071 = vst [vmem:[%s1017 + $0xd0] sm:$0xff] %v1070
                %v1072 = vld [vmem:[%s1016 + $0xd8] sm:$0xff]
                %1073 = vst [vmem:[%s1017 + $0xd8] sm:$0xff] %v1072
                %v1074 = vld [vmem:[%s1016 + $0xe0] sm:$0xff]
                %1075 = vst [vmem:[%s1017 + $0xe0] sm:$0xff] %v1074
                %v1076 = vld [vmem:[%s1016 + $0xe8] sm:$0xff]
                %1077 = vst [vmem:[%s1017 + $0xe8] sm:$0xff] %v1076
                %v1078 = vld [vmem:[%s1016 + $0xf0] sm:$0xff]
                %1079 = vst [vmem:[%s1017 + $0xf0] sm:$0xff] %v1078
                %v1080 = vld [vmem:[%s1016 + $0xf8] sm:$0xff]
                %1081 = vst [vmem:[%s1017 + $0xf8] sm:$0xff] %v1080
                %v1082 = vld [vmem:[%s1016 + $0x100] sm:$0xff]
                %1083 = vst [vmem:[%s1017 + $0x100] sm:$0xff] %v1082
                %v1084 = vld [vmem:[%s1016 + $0x108] sm:$0xff]
                %1085 = vst [vmem:[%s1017 + $0x108] sm:$0xff] %v1084
                %v1086 = vld [vmem:[%s1016 + $0x110] sm:$0xff]
                %1087 = vst [vmem:[%s1017 + $0x110] sm:$0xff] %v1086
                %v1088 = vld [vmem:[%s1016 + $0x118] sm:$0xff]
                %1089 = vst [vmem:[%s1017 + $0x118] sm:$0xff] %v1088
                %v1090 = vld [vmem:[%s1016 + $0x120] sm:$0xff]
                %1091 = vst [vmem:[%s1017 + $0x120] sm:$0xff] %v1090
                %v1092 = vld [vmem:[%s1016 + $0x128] sm:$0xff]
                %1093 = vst [vmem:[%s1017 + $0x128] sm:$0xff] %v1092
                %v1094 = vld [vmem:[%s1016 + $0x130] sm:$0xff]
                %1095 = vst [vmem:[%s1017 + $0x130] sm:$0xff] %v1094
                %v1096 = vld [vmem:[%s1016 + $0x138] sm:$0xff]
                %1097 = vst [vmem:[%s1017 + $0x138] sm:$0xff] %v1096
                %v1098 = vld [vmem:[%s1016 + $0x140] sm:$0xff]
                %1099 = vst [vmem:[%s1017 + $0x140] sm:$0xff] %v1098
                %v1100 = vld [vmem:[%s1016 + $0x148] sm:$0xff]
                %1101 = vst [vmem:[%s1017 + $0x148] sm:$0xff] %v1100
                %v1102 = vld [vmem:[%s1016 + $0x150] sm:$0xff]
                %1103 = vst [vmem:[%s1017 + $0x150] sm:$0xff] %v1102
                %v1104 = vld [vmem:[%s1016 + $0x158] sm:$0xff]
                %1105 = vst [vmem:[%s1017 + $0x158] sm:$0xff] %v1104
                %v1106 = vld [vmem:[%s1016 + $0x160] sm:$0xff]
                %1107 = vst [vmem:[%s1017 + $0x160] sm:$0xff] %v1106
                %v1108 = vld [vmem:[%s1016 + $0x168] sm:$0xff]
                %1109 = vst [vmem:[%s1017 + $0x168] sm:$0xff] %v1108
                %v1110 = vld [vmem:[%s1016 + $0x170] sm:$0xff]
                %1111 = vst [vmem:[%s1017 + $0x170] sm:$0xff] %v1110
                %v1112 = vld [vmem:[%s1016 + $0x178] sm:$0xff]
                %1113 = vst [vmem:[%s1017 + $0x178] sm:$0xff] %v1112
                %v1114 = vld [vmem:[%s1016 + $0x180] sm:$0xff]
                %1115 = vst [vmem:[%s1017 + $0x180] sm:$0xff] %v1114
                %v1116 = vld [vmem:[%s1016 + $0x188] sm:$0xff]
                %1117 = vst [vmem:[%s1017 + $0x188] sm:$0xff] %v1116
                %v1118 = vld [vmem:[%s1016 + $0x190] sm:$0xff]
                %1119 = vst [vmem:[%s1017 + $0x190] sm:$0xff] %v1118
                %v1120 = vld [vmem:[%s1016 + $0x198] sm:$0xff]
                %1121 = vst [vmem:[%s1017 + $0x198] sm:$0xff] %v1120
                %v1122 = vld [vmem:[%s1016 + $0x1a0] sm:$0xff]
                %1123 = vst [vmem:[%s1017 + $0x1a0] sm:$0xff] %v1122
                %v1124 = vld [vmem:[%s1016 + $0x1a8] sm:$0xff]
                %1125 = vst [vmem:[%s1017 + $0x1a8] sm:$0xff] %v1124
                %v1126 = vld [vmem:[%s1016 + $0x1b0] sm:$0xff]
                %1127 = vst [vmem:[%s1017 + $0x1b0] sm:$0xff] %v1126
                %v1128 = vld [vmem:[%s1016 + $0x1b8] sm:$0xff]
                %1129 = vst [vmem:[%s1017 + $0x1b8] sm:$0xff] %v1128
                %v1130 = vld [vmem:[%s1016 + $0x1c0] sm:$0xff]
                %1131 = vst [vmem:[%s1017 + $0x1c0] sm:$0xff] %v1130
                %v1132 = vld [vmem:[%s1016 + $0x1c8] sm:$0xff]
                %1133 = vst [vmem:[%s1017 + $0x1c8] sm:$0xff] %v1132
                %v1134 = vld [vmem:[%s1016 + $0x1d0] sm:$0xff]
                %1135 = vst [vmem:[%s1017 + $0x1d0] sm:$0xff] %v1134
                %v1136 = vld [vmem:[%s1016 + $0x1d8] sm:$0xff]
                %1137 = vst [vmem:[%s1017 + $0x1d8] sm:$0xff] %v1136
                %v1138 = vld [vmem:[%s1016 + $0x1e0] sm:$0xff]
                %1139 = vst [vmem:[%s1017 + $0x1e0] sm:$0xff] %v1138
                %v1140 = vld [vmem:[%s1016 + $0x1e8] sm:$0xff]
                %1141 = vst [vmem:[%s1017 + $0x1e8] sm:$0xff] %v1140
                %v1142 = vld [vmem:[%s1016 + $0x1f0] sm:$0xff]
                %1143 = vst [vmem:[%s1017 + $0x1f0] sm:$0xff] %v1142
                %v1144 = vld [vmem:[%s1016 + $0x1f8] sm:$0xff]
                %1145 = vst [vmem:[%s1017 + $0x1f8] sm:$0xff] %v1144
                %s1146 = sadd.s32 1, %s1015
                %p1147 = scmp.ge.s32.totalorder %s1146, %s1008
                %s1148 = scalar_select %p1147, 0, %s1146
                %s1149 = smul.u32 %s1148, 512
                %s1150 = smul.u32 %s1148, 512
                %s1151 = scalar_lea.vmem %s988, %s1149 [#allocation2]
                %s1152 = scalar_lea.vmem %s999, %s1150
              $region53: #{cnn_forward.4} parent=47 // loop_footer
                %s1012 = sadd.s32 %s1010, 1
              $region54: #{cnn_forward.4} parent=47 // loop_footer_branch
                %1009 = sbr.rel target = $region50
              $region55: #{cnn_forward.4} parent=47 // loop_exit
                _
              %s1153 = sshrl.u32 %s995, 6
              %s1154 = sand.u32 %s995, 63
              %s1155 = smul.u32 %s1153, 64
              %s1156 = smul.u32 8, %s1155
              %s1157 = scalar_lea.vmem %s988, %s1156 [#allocation2]
              %s1158 = smul.u32 8, %s1155
              %s1159 = scalar_lea.vmem %s999, %s1158
              // While loop
              $region56: #{cnn_forward.4} parent=47 // loop_pre_header
                _
              $region57: #{cnn_forward.4} parent=47 // loop_header
                %s1161 = sphi 0, %s1163
                %p1162 = scmp.ge.s32.totalorder %s1161, %s1154
                %s1166 = sphi 0, %s1173
                %s1167 = sphi %s1157, %s1176
                %s1168 = sphi %s1159, %s1177
              $region58: #{cnn_forward.4} parent=47 // loop_header_branch
                %1165 = sbr.rel (%p1162) target = $region62
              $region59: #{cnn_forward.4} parent=47 // loop_body
                %v1169 = vld [vmem:[%s1167] sm:$0xff]
                %1170 = vst [vmem:[%s1168] sm:$0xff] %v1169
                %s1171 = sadd.s32 1, %s1166
                %p1172 = scmp.ge.s32.totalorder %s1171, %s1154
                %s1173 = scalar_select %p1172, 0, %s1171
                %s1174 = smul.u32 %s1173, 8
                %s1175 = smul.u32 %s1173, 8
                %s1176 = scalar_lea.vmem %s1157, %s1174 [#allocation2]
                %s1177 = scalar_lea.vmem %s1159, %s1175
              $region60: #{cnn_forward.4} parent=47 // loop_footer
                %s1163 = sadd.s32 %s1161, 1
              $region61: #{cnn_forward.4} parent=47 // loop_footer_branch
                %1160 = sbr.rel target = $region57
              $region62: #{cnn_forward.4} parent=47 // loop_exit
                _
            $region48: #{cnn_forward.4} parent=39 // pred_fallthru
              _
          $region40: #{cnn_forward.4} parent=35 // pred_fallthru
            _
          %1352 = vnop
        $region36: #{cnn_forward.4} parent=31 // pred_fallthru
          _
      $region32: #{cnn_forward.4} parent=5 // pred_fallthru
        _
      %p1353 = scmp.le.s32.totalorder 2, %s9
      // Predicated region
      $region85: #{cnn_forward.4} parent=5 // pred_check
        %p1354 = pneg %p1353
      $region86: #{cnn_forward.4} parent=5 // pred_check_branch
        %1356 = sbr.rel (%p1354) target = $region88
      $region87: #{cnn_forward.4} parent=5 // pred_region
        %s1357 = ssub.s32 %s9, 2
        // Predicated region
        $region89: #{cnn_forward.4} parent=87 // pred_check
          %p1358 = pneg %p106
        $region90: #{cnn_forward.4} parent=87 // pred_check_branch
          %1360 = sbr.rel (%p1358) target = $region92
        $region91: #{cnn_forward.4} parent=87 // pred_region
          %s1361 = sand.u32 %s91, 1
          %s1362 = sand.u32 %s91, 1
          %s1363 = smul.addr %s1362, 512
          %s1364 = scalar_lea.vmem [#allocation2], %s1363
        $region92: #{cnn_forward.4} parent=87 // pred_fallthru
          _
      $region88: #{cnn_forward.4} parent=5 // pred_fallthru
        _
    $region6: #{cnn_forward.4} parent=1 // loop_footer
      %s13 = sadd.s32 1, %s9
    $region7: #{cnn_forward.4} parent=1 // loop_footer_branch
      %8 = sbr.rel target = $region3
    $region8: #{cnn_forward.4} parent=1 // loop_exit
      _

// kernel: cnn_forward.5
$region0: #{cnn_forward.5}
  #allocation0 [shape = 'u32[]', space=smem, size = 0x4, offset = 0x4, fixed_abs, tag = 'smem constant byte address 0x4 - core index']
  #allocation1 [shape = 'u32[144,128]{1,0:T(1,128)}', space=vmem, size = 0x12000, scoped, tag = 'internal scratch']
  %s0 = inlined_call_operand.vmem [shape: f32[28,84], index: 0, kind: input, shape index: {}]
  %s1 = inlined_call_operand.vmem [shape: f32[28,84], index: 1, kind: input, shape index: {}]
  %s2 = inlined_call_operand.vmem [shape: f32[28,84], index: 2, kind: input, shape index: {}]
  %s3 = inlined_call_operand.vmem [shape: f32[28,84], index: 3, kind: input, shape index: {}]
  %s4 = inlined_call_operand.vmem [shape: f32[28,84], index: 4, kind: output, shape index: {}]
  %s5 = sld [smem:[#allocation0]]
  $region26: #{cnn_forward.5} parent=0
    _
  %s7 = ssub.s32 1, %s5
  %s8 = scalar_select 0, %s7, %s5
  // Predicated region
  $region2: #{cnn_forward.5} parent=0 // pred_check
    _
  $region3: #{cnn_forward.5} parent=0 // pred_check_branch
    %10 = sbr.rel (0) target = $region5
  $region4: #{cnn_forward.5} parent=0 // pred_region
    _
  $region5: #{cnn_forward.5} parent=0 // pred_fallthru
    _
  // Predicated region
  $region6: #{cnn_forward.5} parent=0 // pred_check
    _
  $region7: #{cnn_forward.5} parent=0 // pred_check_branch
    %12 = sbr.rel (0) target = $region9
  $region8: #{cnn_forward.5} parent=0 // pred_region
    _
  $region9: #{cnn_forward.5} parent=0 // pred_fallthru
    _
  // Predicated region
  $region10: #{cnn_forward.5} parent=0 // pred_check
    _
  $region11: #{cnn_forward.5} parent=0 // pred_check_branch
    %14 = sbr.rel (0) target = $region13
  $region12: #{cnn_forward.5} parent=0 // pred_region
    _
  $region13: #{cnn_forward.5} parent=0 // pred_fallthru
    _
  // Predicated region
  $region14: #{cnn_forward.5} parent=0 // pred_check
    _
  $region15: #{cnn_forward.5} parent=0 // pred_check_branch
    %16 = sbr.rel (0) target = $region17
  $region16: #{cnn_forward.5} parent=0 // pred_region
    _
  $region17: #{cnn_forward.5} parent=0 // pred_fallthru
    _
  %v17 = vld [vmem:[%s0] sm:$0xff]
  %v18 = vld [vmem:[%s0 + $0x8] sm:$0xff]
  %v19 = vld [vmem:[%s0 + $0x10] sm:$0xff]
  %v20 = vld [vmem:[%s0 + $0x18] sm:$0xf]
  %v21 = vld [vmem:[%s1] sm:$0xff]
  %v22 = vld [vmem:[%s1 + $0x8] sm:$0xff]
  %v23 = vld [vmem:[%s1 + $0x10] sm:$0xff]
  %v24 = vld [vmem:[%s1 + $0x18] sm:$0xf]
  %v25 = vmax.f32 %v17, %v21
  %v26 = vmax.f32 %v18, %v22
  %v27 = vmax.f32 %v19, %v23
  %v28 = vmax.f32 %v20, %v24
  %v29 = vld [vmem:[%s2] sm:$0xff]
  %v30 = vld [vmem:[%s2 + $0x8] sm:$0xff]
  %v31 = vld [vmem:[%s2 + $0x10] sm:$0xff]
  %v32 = vld [vmem:[%s2 + $0x18] sm:$0xf]
  %v33 = vld [vmem:[%s3] sm:$0xff]
  %v34 = vld [vmem:[%s3 + $0x8] sm:$0xff]
  %v35 = vld [vmem:[%s3 + $0x10] sm:$0xff]
  %v36 = vld [vmem:[%s3 + $0x18] sm:$0xf]
  %v37 = vmax.f32 %v29, %v33
  %v38 = vmax.f32 %v30, %v34
  %v39 = vmax.f32 %v31, %v35
  %v40 = vmax.f32 %v32, %v36
  %v41 = vmax.f32 %v25, %v37
  %v42 = vmax.f32 %v26, %v38
  %v43 = vmax.f32 %v27, %v39
  %v44 = vmax.f32 %v28, %v40
  %vm45 = vcmask 687104
  %46 = vst.msk [vmem:[%s4] sm:$0xff] %vm45, %v41
  %47 = vst.msk [vmem:[%s4 + $0x8] sm:$0xff] %vm45, %v42
  %48 = vst.msk [vmem:[%s4 + $0x10] sm:$0xff] %vm45, %v43
  %vm49 = vcmask 683008
  %50 = vst.msk [vmem:[%s4 + $0x18] sm:$0xf] %vm49, %v44
  // Predicated region
  $region18: #{cnn_forward.5} parent=0 // pred_check
    _
  $region19: #{cnn_forward.5} parent=0 // pred_check_branch
    %52 = sbr.rel (0) target = $region21
  $region20: #{cnn_forward.5} parent=0 // pred_region
    _
  $region21: #{cnn_forward.5} parent=0 // pred_fallthru
    _
  // Predicated region
  $region22: #{cnn_forward.5} parent=0 // pred_check
    _
  $region23: #{cnn_forward.5} parent=0 // pred_check_branch
    %54 = sbr.rel (0) target = $region25
  $region24: #{cnn_forward.5} parent=0 // pred_region
    _
  $region25: #{cnn_forward.5} parent=0 // pred_fallthru
    _

// kernel: cnn_forward.6
$region0: #{cnn_forward.6}
  #allocation0 [shape = 'u32[]', space=smem, size = 0x4, offset = 0x4, fixed_abs, tag = 'smem constant byte address 0x4 - core index']
  #allocation1 [shape = 'u32[144,128]{1,0:T(1,128)}', space=vmem, size = 0x12000, scoped, tag = 'internal scratch']
  %s0 = inlined_call_operand.vmem [shape: bf16[200,150], index: 0, kind: input, shape index: {}]
  %s1 = inlined_call_operand.vmem [shape: bf16[150,16], index: 1, kind: input, shape index: {}]
  %s2 = inlined_call_operand.vmem [shape: f32[1,16], index: 2, kind: input, shape index: {}]
  %s3 = inlined_call_operand.vmem [shape: f32[200,16], index: 3, kind: output, shape index: {}]
  %s4 = sld [smem:[#allocation0]]
  $region22: #{cnn_forward.6} parent=0
    _
  %s6 = ssub.s32 1, %s4
  %s7 = scalar_select 0, %s6, %s4
  // Predicated region
  $region2: #{cnn_forward.6} parent=0 // pred_check
    _
  $region3: #{cnn_forward.6} parent=0 // pred_check_branch
    %9 = sbr.rel (0) target = $region5
  $region4: #{cnn_forward.6} parent=0 // pred_region
    _
  $region5: #{cnn_forward.6} parent=0 // pred_fallthru
    _
  // Predicated region
  $region6: #{cnn_forward.6} parent=0 // pred_check
    _
  $region7: #{cnn_forward.6} parent=0 // pred_check_branch
    %11 = sbr.rel (0) target = $region9
  $region8: #{cnn_forward.6} parent=0 // pred_region
    _
  $region9: #{cnn_forward.6} parent=0 // pred_fallthru
    _
  // Predicated region
  $region10: #{cnn_forward.6} parent=0 // pred_check
    _
  $region11: #{cnn_forward.6} parent=0 // pred_check_branch
    %13 = sbr.rel (0) target = $region13
  $region12: #{cnn_forward.6} parent=0 // pred_region
    _
  $region13: #{cnn_forward.6} parent=0 // pred_fallthru
    _
  %v15 = vld [vmem:[%s0] sm:$0xff]
  %v16 = vld [vmem:[%s0 + $0x8] sm:$0xff]
  %v17 = vld [vmem:[%s0 + $0x10] sm:$0xff]
  %v18 = vld [vmem:[%s0 + $0x18] sm:$0xff]
  %v19 = vld [vmem:[%s0 + $0x20] sm:$0xff]
  %v20 = vld [vmem:[%s0 + $0x28] sm:$0xff]
  %v21 = vld [vmem:[%s0 + $0x30] sm:$0xff]
  %v22 = vld [vmem:[%s0 + $0x38] sm:$0xff]
  %v23 = vld [vmem:[%s0 + $0x40] sm:$0xff]
  %v24 = vld [vmem:[%s0 + $0x48] sm:$0xff]
  %v25 = vld [vmem:[%s0 + $0x50] sm:$0xff]
  %v26 = vld [vmem:[%s0 + $0x58] sm:$0xff]
  %v27 = vld [vmem:[%s0 + $0x60] sm:$0xff]
  %v28 = vld [vmem:[%s0 + $0x68] sm:$0xff]
  %v29 = vld [vmem:[%s0 + $0x70] sm:$0xff]
  %v30 = vld [vmem:[%s0 + $0x78] sm:$0xff]
  %v31 = vld [vmem:[%s0 + $0x80] sm:$0xff]
  %v32 = vld [vmem:[%s0 + $0x88] sm:$0xff]
  %v33 = vld [vmem:[%s0 + $0x90] sm:$0xff]
  %v34 = vld [vmem:[%s0 + $0x98] sm:$0xff]
  %v35 = vld [vmem:[%s0 + $0xa0] sm:$0xff]
  %v36 = vld [vmem:[%s0 + $0xa8] sm:$0xff]
  %v37 = vld [vmem:[%s0 + $0xb0] sm:$0xff]
  %v38 = vld [vmem:[%s0 + $0xb8] sm:$0xff]
  %v39 = vld [vmem:[%s0 + $0xc0] sm:$0xff]
  %v40 = vld [vmem:[%s1] sm:$0xf]
  %v41 = vld [vmem:[%s1 + $0x4] sm:$0xf]
  %v42 = vld [vmem:[%s1 + $0x8] sm:$0xf]
  %v43 = vld [vmem:[%s1 + $0xc] sm:$0xf]
  %v44 = vld [vmem:[%s1 + $0x10] sm:$0xf]
  %v45 = vld [vmem:[%s1 + $0x14] sm:$0xf]
  %v46 = vld [vmem:[%s1 + $0x18] sm:$0xf]
  %v47 = vld [vmem:[%s1 + $0x1c] sm:$0xf]
  %v48 = vld [vmem:[%s1 + $0x20] sm:$0xf]
  %v49 = vld [vmem:[%s1 + $0x24] sm:$0xf]
  %v50 = vld [vmem:[%s1 + $0x28] sm:$0xf]
  %v51 = vld [vmem:[%s1 + $0x2c] sm:$0xf]
  %v52 = vld [vmem:[%s1 + $0x30] sm:$0xf]
  %v53 = vld [vmem:[%s1 + $0x34] sm:$0xf]
  %v54 = vld [vmem:[%s1 + $0x38] sm:$0xf]
  %v55 = vld [vmem:[%s1 + $0x3c] sm:$0xf]
  %v56 = vld [vmem:[%s1 + $0x40] sm:$0xf]
  %v57 = vld [vmem:[%s1 + $0x44] sm:$0xf]
  %v58 = vld [vmem:[%s1 + $0x48] sm:$0x7]
  %v59 = vld [vmem:[%s2] sm:$0x1]
  %v61 = vlaneseq
  %v62 = vshrl.u32 %v61, 7
  %v63 = vsub.s32 0, %v62
  %v64 = vrot.slane %v59, %v63
  %v91 = vunpack.c.l.b16 %v15
  %v92 = vunpack.c.h.b16 %v15
  %v93 = vunpack.c.l.b16 %v16
  %v94 = vunpack.c.h.b16 %v16
  %v95 = vunpack.c.l.b16 %v17
  %v96 = vunpack.c.h.b16 %v17
  %v97 = vunpack.c.l.b16 %v18
  %v98 = vunpack.c.h.b16 %v18
  %v99 = vunpack.c.l.b16 %v19
  %v100 = vunpack.c.h.b16 %v19
  %v101 = vunpack.c.l.b16 %v20
  %v102 = vunpack.c.h.b16 %v20
  %v103 = vunpack.c.l.b16 %v21
  %v104 = vunpack.c.h.b16 %v21
  %v105 = vunpack.c.l.b16 %v22
  %v106 = vunpack.c.h.b16 %v22
  %v107 = vunpack.c.l.b16 %v23
  %v108 = vunpack.c.h.b16 %v23
  %v109 = vunpack.c.l.b16 %v24
  %v110 = vunpack.c.h.b16 %v24
  %v111 = vunpack.c.l.b16 %v25
  %v112 = vunpack.c.h.b16 %v25
  %v113 = vunpack.c.l.b16 %v26
  %v114 = vunpack.c.h.b16 %v26
  %v115 = vunpack.c.l.b16 %v27
  %v116 = vunpack.c.h.b16 %v27
  %v117 = vunpack.c.l.b16 %v28
  %v118 = vunpack.c.h.b16 %v28
  %v119 = vunpack.c.l.b16 %v29
  %v120 = vunpack.c.h.b16 %v29
  %v121 = vunpack.c.l.b16 %v30
  %v122 = vunpack.c.h.b16 %v30
  %v123 = vunpack.c.l.b16 %v31
  %v124 = vunpack.c.h.b16 %v31
  %v125 = vunpack.c.l.b16 %v32
  %v126 = vunpack.c.h.b16 %v32
  %v127 = vunpack.c.l.b16 %v33
  %v128 = vunpack.c.h.b16 %v33
  %v129 = vunpack.c.l.b16 %v34
  %v130 = vunpack.c.h.b16 %v34
  %v131 = vunpack.c.l.b16 %v35
  %v132 = vunpack.c.h.b16 %v35
  %v133 = vunpack.c.l.b16 %v36
  %v134 = vunpack.c.h.b16 %v36
  %v135 = vunpack.c.l.b16 %v37
  %v136 = vunpack.c.h.b16 %v37
  %v137 = vunpack.c.l.b16 %v38
  %v138 = vunpack.c.h.b16 %v38
  %v139 = vunpack.c.l.b16 %v39
  %v140 = vunpack.c.h.b16 %v39
  %v141 = vpack.c.b16 %v93, %v91
  %v142 = vpack.c.b16 %v94, %v92
  %v143 = vpack.c.b16 %v97, %v95
  %v144 = vpack.c.b16 %v98, %v96
  %v145 = vpack.c.b16 %v101, %v99
  %v146 = vpack.c.b16 %v102, %v100
  %v147 = vpack.c.b16 %v105, %v103
  %v148 = vpack.c.b16 %v106, %v104
  %v149 = vpack.c.b16 %v109, %v107
  %v150 = vpack.c.b16 %v110, %v108
  %v151 = vpack.c.b16 %v113, %v111
  %v152 = vpack.c.b16 %v114, %v112
  %v153 = vpack.c.b16 %v117, %v115
  %v154 = vpack.c.b16 %v118, %v116
  %v155 = vpack.c.b16 %v121, %v119
  %v156 = vpack.c.b16 %v122, %v120
  %v157 = vpack.c.b16 %v125, %v123
  %v158 = vpack.c.b16 %v126, %v124
  %v159 = vpack.c.b16 %v129, %v127
  %v160 = vpack.c.b16 %v130, %v128
  %v161 = vpack.c.b16 %v133, %v131
  %v162 = vpack.c.b16 %v134, %v132
  %v163 = vpack.c.b16 %v137, %v135
  %v164 = vpack.c.b16 %v138, %v136
  %v165 = vpack.c.b16 %v139, %v139
  %v166 = vpack.c.b16 %v140, %v140
  %v199 = vunpack.c.l.b16 %v40
  %v200 = vunpack.c.l.b16 %v41
  %v201 = vunpack.c.l.b16 %v42
  %v202 = vunpack.c.l.b16 %v43
  %v203 = vunpack.c.l.b16 %v44
  %v204 = vunpack.c.l.b16 %v45
  %v205 = vunpack.c.l.b16 %v46
  %v206 = vunpack.c.l.b16 %v47
  %v207 = vunpack.c.l.b16 %v48
  %v208 = vunpack.c.l.b16 %v49
  %v209 = vunpack.c.l.b16 %v50
  %v210 = vunpack.c.l.b16 %v51
  %v211 = vunpack.c.l.b16 %v52
  %v212 = vunpack.c.l.b16 %v53
  %v213 = vunpack.c.l.b16 %v54
  %v214 = vunpack.c.l.b16 %v55
  %v215 = vunpack.c.l.b16 %v56
  %v216 = vunpack.c.l.b16 %v57
  %v217 = vunpack.c.l.b16 %v58
  %v218 = vpack.c.b16 %v200, %v199
  %v219 = vpack.c.b16 %v202, %v201
  %v220 = vpack.c.b16 %v204, %v203
  %v221 = vpack.c.b16 %v206, %v205
  %v222 = vpack.c.b16 %v208, %v207
  %v223 = vpack.c.b16 %v210, %v209
  %v224 = vpack.c.b16 %v212, %v211
  %v225 = vpack.c.b16 %v214, %v213
  %v226 = vpack.c.b16 %v216, %v215
  %v227 = vpack.c.b16 %v217, %v217
  %vm237 = vcmask 179200
  %v239 = vsel %vm237, %v142, 0
  %v242 = vsel %vm237, %v144, 0
  %v245 = vsel %vm237, %v146, 0
  %v248 = vsel %vm237, %v148, 0
  %v251 = vsel %vm237, %v150, 0
  %v254 = vsel %vm237, %v152, 0
  %v257 = vsel %vm237, %v154, 0
  %v260 = vsel %vm237, %v156, 0
  %v263 = vsel %vm237, %v158, 0
  %v266 = vsel %vm237, %v160, 0
  %v269 = vsel %vm237, %v162, 0
  %v272 = vsel %vm237, %v164, 0
  %v275 = vsel %vm237, %v166, 0
  %vm277 = vcmask 1042432
  %v279 = vsel %vm277, %v227, 0
  %281 = vmatprep.subr.bf16.mxu0 0
  %282 = vmatpush1.bf16.msra.mxu0 %v218
  %283 = vmatprep.subr.bf16.mxu0 0
  %284 = vmatpush1.bf16.msra.mxu0 %v219
  %285 = vmatprep.subr.bf16.mxu0 0
  %286 = vmatpush1.bf16.msra.mxu0 %v220
  %287 = vmatprep.subr.bf16.mxu0 0
  %288 = vmatpush1.bf16.msra.mxu0 %v221
  %289 = vmatprep.subr.bf16.mxu0 0
  %290 = vmatpush1.bf16.msra.mxu0 %v222
  %291 = vmatprep.subr.bf16.mxu0 0
  %292 = vmatpush1.bf16.msra.mxu0 %v223
  %293 = vmatprep.subr.bf16.mxu0 0
  %294 = vmatpush1.bf16.msra.mxu0 %v224
  %295 = vmatprep.subr.bf16.mxu0 0
  %296 = vmatpush1.bf16.msra.mxu0 %v225
  %297 = vmatprep.subr.bf16.mxu0 0
  %298 = vmatpush1.bf16.msra.mxu0 %v226
  %299 = vmatprep.subr.bf16.mxu0 0
  %300 = vmatpush1.bf16.msra.mxu0 %v279
  %301 = vmatprep.subr.bf16.mxu0 0
  %302 = vmatpush1.bf16.msra.mxu0 0
  %303 = vmatprep.subr.bf16.mxu0 0
  %304 = vmatpush1.bf16.msra.mxu0 0
  %305 = vmatprep.subr.bf16.mxu0 0
  %306 = vmatpush1.bf16.msra.mxu0 0
  %307 = vmatprep.subr.bf16.mxu0 0
  %308 = vmatpush1.bf16.msra.mxu0 0
  %309 = vmatprep.subr.bf16.mxu0 0
  %310 = vmatpush1.bf16.msra.mxu0 0
  %311 = vmatprep.subr.bf16.mxu0 0
  %312 = vmatpush1.bf16.msra.mxu0 0
  %313 = vmatprep.mubr.bf16.mxu0 %v239
  %314 = vmatmul.mubr.bf16.gmra.mrb[0].mxu0 %v141
  %v315 = vpop.f32.mrb[0].mxu0
  %v316 = vadd.f32 %v64, %v315
  %v317 = vpop.f32.mrb[0].mxu0
  %v318 = vpop.f32.mrb[0].mxu0
  %v319 = vadd.f32 %v64, %v318
  %v320 = vpop.f32.mrb[0].mxu0
  %321 = vmatprep.mubr.bf16.mxu0 %v242
  %322 = vmatmul.mubr.bf16.gmra.mrb[0].mxu0 %v143
  %v323 = vpop.f32.mrb[0].mxu0
  %v324 = vadd.f32 %v64, %v323
  %v325 = vpop.f32.mrb[0].mxu0
  %v326 = vpop.f32.mrb[0].mxu0
  %v327 = vadd.f32 %v64, %v326
  %v328 = vpop.f32.mrb[0].mxu0
  %329 = vmatprep.mubr.bf16.mxu0 %v245
  %330 = vmatmul.mubr.bf16.gmra.mrb[0].mxu0 %v145
  %v331 = vpop.f32.mrb[0].mxu0
  %v332 = vadd.f32 %v64, %v331
  %v333 = vpop.f32.mrb[0].mxu0
  %v334 = vpop.f32.mrb[0].mxu0
  %v335 = vadd.f32 %v64, %v334
  %v336 = vpop.f32.mrb[0].mxu0
  %337 = vmatprep.mubr.bf16.mxu0 %v248
  %338 = vmatmul.mubr.bf16.gmra.mrb[0].mxu0 %v147
  %v339 = vpop.f32.mrb[0].mxu0
  %v340 = vadd.f32 %v64, %v339
  %v341 = vpop.f32.mrb[0].mxu0
  %v342 = vpop.f32.mrb[0].mxu0
  %v343 = vadd.f32 %v64, %v342
  %v344 = vpop.f32.mrb[0].mxu0
  %345 = vmatprep.mubr.bf16.mxu0 %v251
  %346 = vmatmul.mubr.bf16.gmra.mrb[0].mxu0 %v149
  %v347 = vpop.f32.mrb[0].mxu0
  %v348 = vadd.f32 %v64, %v347
  %v349 = vpop.f32.mrb[0].mxu0
  %v350 = vpop.f32.mrb[0].mxu0
  %v351 = vadd.f32 %v64, %v350
  %v352 = vpop.f32.mrb[0].mxu0
  %353 = vmatprep.mubr.bf16.mxu0 %v254
  %354 = vmatmul.mubr.bf16.gmra.mrb[0].mxu0 %v151
  %v355 = vpop.f32.mrb[0].mxu0
  %v356 = vadd.f32 %v64, %v355
  %v357 = vpop.f32.mrb[0].mxu0
  %v358 = vpop.f32.mrb[0].mxu0
  %v359 = vadd.f32 %v64, %v358
  %v360 = vpop.f32.mrb[0].mxu0
  %361 = vmatprep.mubr.bf16.mxu0 %v257
  %362 = vmatmul.mubr.bf16.gmra.mrb[0].mxu0 %v153
  %v363 = vpop.f32.mrb[0].mxu0
  %v364 = vadd.f32 %v64, %v363
  %v365 = vpop.f32.mrb[0].mxu0
  %v366 = vpop.f32.mrb[0].mxu0
  %v367 = vadd.f32 %v64, %v366
  %v368 = vpop.f32.mrb[0].mxu0
  %369 = vmatprep.mubr.bf16.mxu0 %v260
  %370 = vmatmul.mubr.bf16.gmra.mrb[0].mxu0 %v155
  %v371 = vpop.f32.mrb[0].mxu0
  %v372 = vadd.f32 %v64, %v371
  %v373 = vpop.f32.mrb[0].mxu0
  %v374 = vpop.f32.mrb[0].mxu0
  %v375 = vadd.f32 %v64, %v374
  %v376 = vpop.f32.mrb[0].mxu0
  %377 = vmatprep.mubr.bf16.mxu0 %v263
  %378 = vmatmul.mubr.bf16.gmra.mrb[0].mxu0 %v157
  %v379 = vpop.f32.mrb[0].mxu0
  %v380 = vadd.f32 %v64, %v379
  %v381 = vpop.f32.mrb[0].mxu0
  %v382 = vpop.f32.mrb[0].mxu0
  %v383 = vadd.f32 %v64, %v382
  %v384 = vpop.f32.mrb[0].mxu0
  %385 = vmatprep.mubr.bf16.mxu0 %v266
  %386 = vmatmul.mubr.bf16.gmra.mrb[0].mxu0 %v159
  %v387 = vpop.f32.mrb[0].mxu0
  %v388 = vadd.f32 %v64, %v387
  %v389 = vpop.f32.mrb[0].mxu0
  %v390 = vpop.f32.mrb[0].mxu0
  %v391 = vadd.f32 %v64, %v390
  %v392 = vpop.f32.mrb[0].mxu0
  %393 = vmatprep.mubr.bf16.mxu0 %v269
  %394 = vmatmul.mubr.bf16.gmra.mrb[0].mxu0 %v161
  %v395 = vpop.f32.mrb[0].mxu0
  %v396 = vadd.f32 %v64, %v395
  %v397 = vpop.f32.mrb[0].mxu0
  %v398 = vpop.f32.mrb[0].mxu0
  %v399 = vadd.f32 %v64, %v398
  %v400 = vpop.f32.mrb[0].mxu0
  %401 = vmatprep.mubr.bf16.mxu0 %v272
  %402 = vmatmul.mubr.bf16.gmra.mrb[0].mxu0 %v163
  %v403 = vpop.f32.mrb[0].mxu0
  %v404 = vadd.f32 %v64, %v403
  %v405 = vpop.f32.mrb[0].mxu0
  %v406 = vpop.f32.mrb[0].mxu0
  %v407 = vadd.f32 %v64, %v406
  %v408 = vpop.f32.mrb[0].mxu0
  %409 = vmatprep.mubr.bf16.mxu0 %v275
  %410 = vmatmul.mubr.bf16.gmra.mrb[0].mxu0 %v165
  %v411 = vpop.f32.mrb[0].mxu0
  %v412 = vadd.f32 %v64, %v411
  %v413 = vpop.f32.mrb[0].mxu0
  %v414 = vpop.f32.mrb[0].mxu0
  %v415 = vpop.f32.mrb[0].mxu0
  %416 = vdwg.mxu0
  %v417 = vmax.f32 %v316, 0.0
  %v418 = vmax.f32 %v319, 0.0
  %v419 = vmax.f32 %v324, 0.0
  %v420 = vmax.f32 %v327, 0.0
  %v421 = vmax.f32 %v332, 0.0
  %v422 = vmax.f32 %v335, 0.0
  %v423 = vmax.f32 %v340, 0.0
  %v424 = vmax.f32 %v343, 0.0
  %v425 = vmax.f32 %v348, 0.0
  %v426 = vmax.f32 %v351, 0.0
  %v427 = vmax.f32 %v356, 0.0
  %v428 = vmax.f32 %v359, 0.0
  %v429 = vmax.f32 %v364, 0.0
  %v430 = vmax.f32 %v367, 0.0
  %v431 = vmax.f32 %v372, 0.0
  %v432 = vmax.f32 %v375, 0.0
  %v433 = vmax.f32 %v380, 0.0
  %v434 = vmax.f32 %v383, 0.0
  %v435 = vmax.f32 %v388, 0.0
  %v436 = vmax.f32 %v391, 0.0
  %v437 = vmax.f32 %v396, 0.0
  %v438 = vmax.f32 %v399, 0.0
  %v439 = vmax.f32 %v404, 0.0
  %v440 = vmax.f32 %v407, 0.0
  %v441 = vmax.f32 %v412, 0.0
  %vm442 = vcmask 130048
  %443 = vst.msk [vmem:[%s3] sm:$0xff] %vm442, %v417
  %444 = vst.msk [vmem:[%s3 + $0x8] sm:$0xff] %vm442, %v418
  %445 = vst.msk [vmem:[%s3 + $0x10] sm:$0xff] %vm442, %v419
  %446 = vst.msk [vmem:[%s3 + $0x18] sm:$0xff] %vm442, %v420
  %447 = vst.msk [vmem:[%s3 + $0x20] sm:$0xff] %vm442, %v421
  %448 = vst.msk [vmem:[%s3 + $0x28] sm:$0xff] %vm442, %v422
  %449 = vst.msk [vmem:[%s3 + $0x30] sm:$0xff] %vm442, %v423
  %450 = vst.msk [vmem:[%s3 + $0x38] sm:$0xff] %vm442, %v424
  %451 = vst.msk [vmem:[%s3 + $0x40] sm:$0xff] %vm442, %v425
  %452 = vst.msk [vmem:[%s3 + $0x48] sm:$0xff] %vm442, %v426
  %453 = vst.msk [vmem:[%s3 + $0x50] sm:$0xff] %vm442, %v427
  %454 = vst.msk [vmem:[%s3 + $0x58] sm:$0xff] %vm442, %v428
  %455 = vst.msk [vmem:[%s3 + $0x60] sm:$0xff] %vm442, %v429
  %456 = vst.msk [vmem:[%s3 + $0x68] sm:$0xff] %vm442, %v430
  %457 = vst.msk [vmem:[%s3 + $0x70] sm:$0xff] %vm442, %v431
  %458 = vst.msk [vmem:[%s3 + $0x78] sm:$0xff] %vm442, %v432
  %459 = vst.msk [vmem:[%s3 + $0x80] sm:$0xff] %vm442, %v433
  %460 = vst.msk [vmem:[%s3 + $0x88] sm:$0xff] %vm442, %v434
  %461 = vst.msk [vmem:[%s3 + $0x90] sm:$0xff] %vm442, %v435
  %462 = vst.msk [vmem:[%s3 + $0x98] sm:$0xff] %vm442, %v436
  %463 = vst.msk [vmem:[%s3 + $0xa0] sm:$0xff] %vm442, %v437
  %464 = vst.msk [vmem:[%s3 + $0xa8] sm:$0xff] %vm442, %v438
  %465 = vst.msk [vmem:[%s3 + $0xb0] sm:$0xff] %vm442, %v439
  %466 = vst.msk [vmem:[%s3 + $0xb8] sm:$0xff] %vm442, %v440
  %467 = vst.msk [vmem:[%s3 + $0xc0] sm:$0xff] %vm442, %v441
  // Predicated region
  $region14: #{cnn_forward.6} parent=0 // pred_check
    _
  $region15: #{cnn_forward.6} parent=0 // pred_check_branch
    %469 = sbr.rel (0) target = $region17
  $region16: #{cnn_forward.6} parent=0 // pred_region
    _
  $region17: #{cnn_forward.6} parent=0 // pred_fallthru
    _
  // Predicated region
  $region18: #{cnn_forward.6} parent=0 // pred_check
    _
  $region19: #{cnn_forward.6} parent=0 // pred_check_branch
    %471 = sbr.rel (0) target = $region21
  $region20: #{cnn_forward.6} parent=0 // pred_region
    _
  $region21: #{cnn_forward.6} parent=0 // pred_fallthru
    _

// kernel: cnn_forward.7
$region0: #{cnn_forward.7}
  #allocation0 [shape = 'u32[]', space=smem, size = 0x4, offset = 0x4, fixed_abs, tag = 'smem constant byte address 0x4 - core index']
  #allocation1 [shape = 'u32[144,128]{1,0:T(1,128)}', space=vmem, size = 0x12000, scoped, tag = 'internal scratch']
  %s0 = inlined_call_operand.vmem [shape: f32[2,400], index: 0, kind: input, shape index: {}]
  %s1 = inlined_call_operand.vmem [shape: f32[2,400], index: 1, kind: input, shape index: {}]
  %s2 = inlined_call_operand.vmem [shape: f32[2,400], index: 2, kind: input, shape index: {}]
  %s3 = inlined_call_operand.vmem [shape: f32[2,400], index: 3, kind: input, shape index: {}]
  %s4 = inlined_call_operand.vmem [shape: bf16[400,120], index: 4, kind: input, shape index: {}]
  %s5 = inlined_call_operand.vmem [shape: f32[1,120], index: 5, kind: input, shape index: {}]
  %s6 = inlined_call_operand.vmem [shape: bf16[120,84], index: 6, kind: input, shape index: {}]
  %s7 = inlined_call_operand.vmem [shape: f32[1,84], index: 7, kind: input, shape index: {}]
  %s8 = inlined_call_operand.vmem [shape: bf16[84,11], index: 8, kind: input, shape index: {}]
  %s9 = inlined_call_operand.vmem [shape: f32[1,11], index: 9, kind: input, shape index: {}]
  %s10 = inlined_call_operand.hbm [shape: f32[2,11], index: 10, kind: output, shape index: {}]
  %s11 = sld [smem:[#allocation0]]
  $region50: #{cnn_forward.7} parent=0
    _
  %s13 = ssub.s32 1, %s11
  %s14 = scalar_select 0, %s13, %s11
  $region1: #{cnn_forward.7} parent=0
    #allocation2 [shape = 'u8[1024]{0}', space=vmem, size = 0x400, scoped, tag = 'output window, operand 0, single buffered']
    #allocation3 [shape = 's32[1]{0}', space=sflag, size = 0x4, scoped, tag = 'scoped memory for cnn_forward.7']
    %15 = vsyncpa [#allocation3], 0
    // Predicated region
    $region2: #{cnn_forward.7} parent=1 // pred_check
      _
    $region3: #{cnn_forward.7} parent=1 // pred_check_branch
      %17 = sbr.rel (0) target = $region5
    $region4: #{cnn_forward.7} parent=1 // pred_region
      _
    $region5: #{cnn_forward.7} parent=1 // pred_fallthru
      _
    // Predicated region
    $region6: #{cnn_forward.7} parent=1 // pred_check
      _
    $region7: #{cnn_forward.7} parent=1 // pred_check_branch
      %19 = sbr.rel (0) target = $region9
    $region8: #{cnn_forward.7} parent=1 // pred_region
      _
    $region9: #{cnn_forward.7} parent=1 // pred_fallthru
      _
    // Predicated region
    $region10: #{cnn_forward.7} parent=1 // pred_check
      _
    $region11: #{cnn_forward.7} parent=1 // pred_check_branch
      %21 = sbr.rel (0) target = $region13
    $region12: #{cnn_forward.7} parent=1 // pred_region
      _
    $region13: #{cnn_forward.7} parent=1 // pred_fallthru
      _
    // Predicated region
    $region14: #{cnn_forward.7} parent=1 // pred_check
      _
    $region15: #{cnn_forward.7} parent=1 // pred_check_branch
      %23 = sbr.rel (0) target = $region17
    $region16: #{cnn_forward.7} parent=1 // pred_region
      _
    $region17: #{cnn_forward.7} parent=1 // pred_fallthru
      _
    // Predicated region
    $region18: #{cnn_forward.7} parent=1 // pred_check
      _
    $region19: #{cnn_forward.7} parent=1 // pred_check_branch
      %25 = sbr.rel (0) target = $region21
    $region20: #{cnn_forward.7} parent=1 // pred_region
      _
    $region21: #{cnn_forward.7} parent=1 // pred_fallthru
      _
    // Predicated region
    $region22: #{cnn_forward.7} parent=1 // pred_check
      _
    $region23: #{cnn_forward.7} parent=1 // pred_check_branch
      %27 = sbr.rel (0) target = $region25
    $region24: #{cnn_forward.7} parent=1 // pred_region
      _
    $region25: #{cnn_forward.7} parent=1 // pred_fallthru
      _
    // Predicated region
    $region26: #{cnn_forward.7} parent=1 // pred_check
      _
    $region27: #{cnn_forward.7} parent=1 // pred_check_branch
      %29 = sbr.rel (0) target = $region29
    $region28: #{cnn_forward.7} parent=1 // pred_region
      _
    $region29: #{cnn_forward.7} parent=1 // pred_fallthru
      _
    // Predicated region
    $region30: #{cnn_forward.7} parent=1 // pred_check
      _
    $region31: #{cnn_forward.7} parent=1 // pred_check_branch
      %31 = sbr.rel (0) target = $region33
    $region32: #{cnn_forward.7} parent=1 // pred_region
      _
    $region33: #{cnn_forward.7} parent=1 // pred_fallthru
      _
    // Predicated region
    $region34: #{cnn_forward.7} parent=1 // pred_check
      _
    $region35: #{cnn_forward.7} parent=1 // pred_check_branch
      %33 = sbr.rel (0) target = $region37
    $region36: #{cnn_forward.7} parent=1 // pred_region
      _
    $region37: #{cnn_forward.7} parent=1 // pred_fallthru
      _
    // Predicated region
    $region38: #{cnn_forward.7} parent=1 // pred_check
      _
    $region39: #{cnn_forward.7} parent=1 // pred_check_branch
      %35 = sbr.rel (0) target = $region41
    $region40: #{cnn_forward.7} parent=1 // pred_region
      _
    $region41: #{cnn_forward.7} parent=1 // pred_fallthru
      _
    %v37 = vld [vmem:[%s0] sm:$0xff]
    %v38 = vld [vmem:[%s1] sm:$0xff]
    %v39 = vmax.f32 %v37, %v38
    %v40 = vld [vmem:[%s2] sm:$0xff]
    %v41 = vld [vmem:[%s3] sm:$0xff]
    %v42 = vmax.f32 %v40, %v41
    %v43 = vmax.f32 %v39, %v42
    %v45 = vcombine.high %v43, %v43
    %v47 = vunpack.c.l.s4 1983009808
    %v48 = vunpack.c.0.s8 %v47
    %v49 = vlaneseq
    %v50 = vshrl.u32 %v49, 7
    %v51 = vsub.s32 %v48, %v50
    %v52 = vrot.slane %v43, %v51
    %v54 = vunpack.c.l.s4 1983009808
    %v55 = vunpack.c.0.s8 %v54
    %v56 = vlaneseq
    %v57 = vshrl.u32 %v56, 7
    %v58 = vsub.s32 %v55, %v57
    %v59 = vrot.slane %v45, %v58
    %v60 = vcombine.high %v52, %v52
    %v61 = vcombine.high %v59, %v59
    %v66 = vpack.c.bf16 %v52, %v52
    %v67 = vpack.c.bf16 %v60, %v60
    %v68 = vpack.c.bf16 %v59, %v59
    %v69 = vpack.c.bf16 %v61, %v61
    %v70 = vld [vmem:[%s4] sm:$0xf]
    %v71 = vld [vmem:[%s4 + $0x4] sm:$0xf]
    %v72 = vld [vmem:[%s4 + $0x8] sm:$0xf]
    %v73 = vld [vmem:[%s4 + $0xc] sm:$0xf]
    %v74 = vld [vmem:[%s4 + $0x10] sm:$0xf]
    %v75 = vld [vmem:[%s4 + $0x14] sm:$0xf]
    %v76 = vld [vmem:[%s4 + $0x18] sm:$0xf]
    %v77 = vld [vmem:[%s4 + $0x1c] sm:$0xf]
    %v78 = vld [vmem:[%s4 + $0x20] sm:$0xf]
    %v79 = vld [vmem:[%s4 + $0x24] sm:$0xf]
    %v80 = vld [vmem:[%s4 + $0x28] sm:$0xf]
    %v81 = vld [vmem:[%s4 + $0x2c] sm:$0xf]
    %v82 = vld [vmem:[%s4 + $0x30] sm:$0xf]
    %v83 = vld [vmem:[%s4 + $0x34] sm:$0xf]
    %v84 = vld [vmem:[%s4 + $0x38] sm:$0xf]
    %v85 = vld [vmem:[%s4 + $0x3c] sm:$0xf]
    %v86 = vld [vmem:[%s4 + $0x40] sm:$0xf]
    %v87 = vld [vmem:[%s4 + $0x44] sm:$0xf]
    %v88 = vld [vmem:[%s4 + $0x48] sm:$0xf]
    %v89 = vld [vmem:[%s4 + $0x4c] sm:$0xf]
    %v90 = vld [vmem:[%s4 + $0x50] sm:$0xf]
    %v91 = vld [vmem:[%s4 + $0x54] sm:$0xf]
    %v92 = vld [vmem:[%s4 + $0x58] sm:$0xf]
    %v93 = vld [vmem:[%s4 + $0x5c] sm:$0xf]
    %v94 = vld [vmem:[%s4 + $0x60] sm:$0xf]
    %v95 = vld [vmem:[%s4 + $0x64] sm:$0xf]
    %v96 = vld [vmem:[%s4 + $0x68] sm:$0xf]
    %v97 = vld [vmem:[%s4 + $0x6c] sm:$0xf]
    %v98 = vld [vmem:[%s4 + $0x70] sm:$0xf]
    %v99 = vld [vmem:[%s4 + $0x74] sm:$0xf]
    %v100 = vld [vmem:[%s4 + $0x78] sm:$0xf]
    %v101 = vld [vmem:[%s4 + $0x7c] sm:$0xf]
    %v102 = vld [vmem:[%s4 + $0x80] sm:$0xf]
    %v103 = vld [vmem:[%s4 + $0x84] sm:$0xf]
    %v104 = vld [vmem:[%s4 + $0x88] sm:$0xf]
    %v105 = vld [vmem:[%s4 + $0x8c] sm:$0xf]
    %v106 = vld [vmem:[%s4 + $0x90] sm:$0xf]
    %v107 = vld [vmem:[%s4 + $0x94] sm:$0xf]
    %v108 = vld [vmem:[%s4 + $0x98] sm:$0xf]
    %v109 = vld [vmem:[%s4 + $0x9c] sm:$0xf]
    %v110 = vld [vmem:[%s4 + $0xa0] sm:$0xf]
    %v111 = vld [vmem:[%s4 + $0xa4] sm:$0xf]
    %v112 = vld [vmem:[%s4 + $0xa8] sm:$0xf]
    %v113 = vld [vmem:[%s4 + $0xac] sm:$0xf]
    %v114 = vld [vmem:[%s4 + $0xb0] sm:$0xf]
    %v115 = vld [vmem:[%s4 + $0xb4] sm:$0xf]
    %v116 = vld [vmem:[%s4 + $0xb8] sm:$0xf]
    %v117 = vld [vmem:[%s4 + $0xbc] sm:$0xf]
    %v118 = vld [vmem:[%s4 + $0xc0] sm:$0xf]
    %v119 = vld [vmem:[%s4 + $0xc4] sm:$0xf]
    %v120 = vld [vmem:[%s5] sm:$0x1]
    %v122 = vlaneseq
    %v123 = vshrl.u32 %v122, 7
    %v124 = vsub.s32 0, %v123
    %v125 = vrot.slane %v120, %v124
    %v177 = vunpack.c.l.b16 %v70
    %v178 = vunpack.c.l.b16 %v71
    %v179 = vunpack.c.l.b16 %v72
    %v180 = vunpack.c.l.b16 %v73
    %v181 = vunpack.c.l.b16 %v74
    %v182 = vunpack.c.l.b16 %v75
    %v183 = vunpack.c.l.b16 %v76
    %v184 = vunpack.c.l.b16 %v77
    %v185 = vunpack.c.l.b16 %v78
    %v186 = vunpack.c.l.b16 %v79
    %v187 = vunpack.c.l.b16 %v80
    %v188 = vunpack.c.l.b16 %v81
    %v189 = vunpack.c.l.b16 %v82
    %v190 = vunpack.c.l.b16 %v83
    %v191 = vunpack.c.l.b16 %v84
    %v192 = vunpack.c.l.b16 %v85
    %v193 = vunpack.c.l.b16 %v86
    %v194 = vunpack.c.l.b16 %v87
    %v195 = vunpack.c.l.b16 %v88
    %v196 = vunpack.c.l.b16 %v89
    %v197 = vunpack.c.l.b16 %v90
    %v198 = vunpack.c.l.b16 %v91
    %v199 = vunpack.c.l.b16 %v92
    %v200 = vunpack.c.l.b16 %v93
    %v201 = vunpack.c.l.b16 %v94
    %v202 = vunpack.c.l.b16 %v95
    %v203 = vunpack.c.l.b16 %v96
    %v204 = vunpack.c.l.b16 %v97
    %v205 = vunpack.c.l.b16 %v98
    %v206 = vunpack.c.l.b16 %v99
    %v207 = vunpack.c.l.b16 %v100
    %v208 = vunpack.c.l.b16 %v101
    %v209 = vunpack.c.l.b16 %v102
    %v210 = vunpack.c.l.b16 %v103
    %v211 = vunpack.c.l.b16 %v104
    %v212 = vunpack.c.l.b16 %v105
    %v213 = vunpack.c.l.b16 %v106
    %v214 = vunpack.c.l.b16 %v107
    %v215 = vunpack.c.l.b16 %v108
    %v216 = vunpack.c.l.b16 %v109
    %v217 = vunpack.c.l.b16 %v110
    %v218 = vunpack.c.l.b16 %v111
    %v219 = vunpack.c.l.b16 %v112
    %v220 = vunpack.c.l.b16 %v113
    %v221 = vunpack.c.l.b16 %v114
    %v222 = vunpack.c.l.b16 %v115
    %v223 = vunpack.c.l.b16 %v116
    %v224 = vunpack.c.l.b16 %v117
    %v225 = vunpack.c.l.b16 %v118
    %v226 = vunpack.c.l.b16 %v119
    %v227 = vpack.c.b16 %v178, %v177
    %v228 = vpack.c.b16 %v180, %v179
    %v229 = vpack.c.b16 %v182, %v181
    %v230 = vpack.c.b16 %v184, %v183
    %v231 = vpack.c.b16 %v186, %v185
    %v232 = vpack.c.b16 %v188, %v187
    %v233 = vpack.c.b16 %v190, %v189
    %v234 = vpack.c.b16 %v192, %v191
    %v235 = vpack.c.b16 %v194, %v193
    %v236 = vpack.c.b16 %v196, %v195
    %v237 = vpack.c.b16 %v198, %v197
    %v238 = vpack.c.b16 %v200, %v199
    %v239 = vpack.c.b16 %v202, %v201
    %v240 = vpack.c.b16 %v204, %v203
    %v241 = vpack.c.b16 %v206, %v205
    %v242 = vpack.c.b16 %v208, %v207
    %v243 = vpack.c.b16 %v210, %v209
    %v244 = vpack.c.b16 %v212, %v211
    %v245 = vpack.c.b16 %v214, %v213
    %v246 = vpack.c.b16 %v216, %v215
    %v247 = vpack.c.b16 %v218, %v217
    %v248 = vpack.c.b16 %v220, %v219
    %v249 = vpack.c.b16 %v222, %v221
    %v250 = vpack.c.b16 %v224, %v223
    %v251 = vpack.c.b16 %v226, %v225
    %vm277 = vcmask 130048
    %v279 = vsel %vm277, %v69, 0
    %281 = vmatprep.subr.bf16.mxu0 0
    %282 = vmatpush1.bf16.msra.mxu0 %v227
    %283 = vmatprep.subr.bf16.mxu0 0
    %284 = vmatpush1.bf16.msra.mxu0 %v228
    %285 = vmatprep.subr.bf16.mxu0 0
    %286 = vmatpush1.bf16.msra.mxu0 %v229
    %287 = vmatprep.subr.bf16.mxu0 0
    %288 = vmatpush1.bf16.msra.mxu0 %v230
    %289 = vmatprep.subr.bf16.mxu0 0
    %290 = vmatpush1.bf16.msra.mxu0 %v231
    %291 = vmatprep.subr.bf16.mxu0 0
    %292 = vmatpush1.bf16.msra.mxu0 %v232
    %293 = vmatprep.subr.bf16.mxu0 0
    %294 = vmatpush1.bf16.msra.mxu0 %v233
    %295 = vmatprep.subr.bf16.mxu0 0
    %296 = vmatpush1.bf16.msra.mxu0 %v234
    %297 = vmatprep.subr.bf16.mxu0 0
    %298 = vmatpush1.bf16.msra.mxu0 %v235
    %299 = vmatprep.subr.bf16.mxu0 0
    %300 = vmatpush1.bf16.msra.mxu0 %v236
    %301 = vmatprep.subr.bf16.mxu0 0
    %302 = vmatpush1.bf16.msra.mxu0 %v237
    %303 = vmatprep.subr.bf16.mxu0 0
    %304 = vmatpush1.bf16.msra.mxu0 %v238
    %305 = vmatprep.subr.bf16.mxu0 0
    %306 = vmatpush1.bf16.msra.mxu0 %v239
    %307 = vmatprep.subr.bf16.mxu0 0
    %308 = vmatpush1.bf16.msra.mxu0 %v240
    %309 = vmatprep.subr.bf16.mxu0 0
    %310 = vmatpush1.bf16.msra.mxu0 %v241
    %311 = vmatprep.subr.bf16.mxu0 0
    %312 = vmatpush1.bf16.msra.mxu0 %v242
    %313 = vmatprep.mubr.bf16.mxu0 %v67
    %314 = vmatmul.mubr.bf16.gmra.mrb[0].mxu0 %v66
    %v315 = vpop.f32.mrb[0].mxu0
    %v316 = vadd.f32 %v125, %v315
    %v317 = vpop.f32.mrb[0].mxu0
    %v318 = vpop.f32.mrb[0].mxu0
    %v319 = vpop.f32.mrb[0].mxu0
    %320 = vdwg.mxu0
    %321 = vmatprep.subr.bf16.mxu0 0
    %322 = vmatpush1.bf16.msra.mxu0 %v243
    %323 = vmatprep.subr.bf16.mxu0 0
    %324 = vmatpush1.bf16.msra.mxu0 %v244
    %325 = vmatprep.subr.bf16.mxu0 0
    %326 = vmatpush1.bf16.msra.mxu0 %v245
    %327 = vmatprep.subr.bf16.mxu0 0
    %328 = vmatpush1.bf16.msra.mxu0 %v246
    %329 = vmatprep.subr.bf16.mxu0 0
    %330 = vmatpush1.bf16.msra.mxu0 %v247
    %331 = vmatprep.subr.bf16.mxu0 0
    %332 = vmatpush1.bf16.msra.mxu0 %v248
    %333 = vmatprep.subr.bf16.mxu0 0
    %334 = vmatpush1.bf16.msra.mxu0 %v249
    %335 = vmatprep.subr.bf16.mxu0 0
    %336 = vmatpush1.bf16.msra.mxu0 %v250
    %337 = vmatprep.subr.bf16.mxu0 0
    %338 = vmatpush1.bf16.msra.mxu0 %v251
    %339 = vmatprep.subr.bf16.mxu0 0
    %340 = vmatpush1.bf16.msra.mxu0 0
    %341 = vmatprep.subr.bf16.mxu0 0
    %342 = vmatpush1.bf16.msra.mxu0 0
    %343 = vmatprep.subr.bf16.mxu0 0
    %344 = vmatpush1.bf16.msra.mxu0 0
    %345 = vmatprep.subr.bf16.mxu0 0
    %346 = vmatpush1.bf16.msra.mxu0 0
    %347 = vmatprep.subr.bf16.mxu0 0
    %348 = vmatpush1.bf16.msra.mxu0 0
    %349 = vmatprep.subr.bf16.mxu0 0
    %350 = vmatpush1.bf16.msra.mxu0 0
    %351 = vmatprep.subr.bf16.mxu0 0
    %352 = vmatpush1.bf16.msra.mxu0 0
    %353 = vmatprep.mubr.bf16.mxu0 %v279
    %354 = vmatmul.mubr.bf16.gmra.mrb[0].mxu0 %v68
    %v355 = vpop.f32.mrb[0].mxu0
    %v356 = vadd.f32 %v316, %v355
    %v357 = vpop.f32.mrb[0].mxu0
    %v358 = vpop.f32.mrb[0].mxu0
    %v359 = vpop.f32.mrb[0].mxu0
    %360 = vdwg.mxu0
    %v361 = vmax.f32 %v356, 0.0
    %v362 = vpack.c.bf16 %v361, %v361
    %v363 = vld [vmem:[%s6] sm:$0xf]
    %v364 = vld [vmem:[%s6 + $0x4] sm:$0xf]
    %v365 = vld [vmem:[%s6 + $0x8] sm:$0xf]
    %v366 = vld [vmem:[%s6 + $0xc] sm:$0xf]
    %v367 = vld [vmem:[%s6 + $0x10] sm:$0xf]
    %v368 = vld [vmem:[%s6 + $0x14] sm:$0xf]
    %v369 = vld [vmem:[%s6 + $0x18] sm:$0xf]
    %v370 = vld [vmem:[%s6 + $0x1c] sm:$0xf]
    %v371 = vld [vmem:[%s6 + $0x20] sm:$0xf]
    %v372 = vld [vmem:[%s6 + $0x24] sm:$0xf]
    %v373 = vld [vmem:[%s6 + $0x28] sm:$0xf]
    %v374 = vld [vmem:[%s6 + $0x2c] sm:$0xf]
    %v375 = vld [vmem:[%s6 + $0x30] sm:$0xf]
    %v376 = vld [vmem:[%s6 + $0x34] sm:$0xf]
    %v377 = vld [vmem:[%s6 + $0x38] sm:$0xf]
    %v378 = vld [vmem:[%s7] sm:$0x1]
    %v380 = vlaneseq
    %v381 = vshrl.u32 %v380, 7
    %v382 = vsub.s32 0, %v381
    %v383 = vrot.slane %v378, %v382
    %v400 = vunpack.c.l.b16 %v363
    %v401 = vunpack.c.l.b16 %v364
    %v402 = vunpack.c.l.b16 %v365
    %v403 = vunpack.c.l.b16 %v366
    %v404 = vunpack.c.l.b16 %v367
    %v405 = vunpack.c.l.b16 %v368
    %v406 = vunpack.c.l.b16 %v369
    %v407 = vunpack.c.l.b16 %v370
    %v408 = vunpack.c.l.b16 %v371
    %v409 = vunpack.c.l.b16 %v372
    %v410 = vunpack.c.l.b16 %v373
    %v411 = vunpack.c.l.b16 %v374
    %v412 = vunpack.c.l.b16 %v375
    %v413 = vunpack.c.l.b16 %v376
    %v414 = vunpack.c.l.b16 %v377
    %v415 = vpack.c.b16 %v401, %v400
    %v416 = vpack.c.b16 %v403, %v402
    %v417 = vpack.c.b16 %v405, %v404
    %v418 = vpack.c.b16 %v407, %v406
    %v419 = vpack.c.b16 %v409, %v408
    %v420 = vpack.c.b16 %v411, %v410
    %v421 = vpack.c.b16 %v413, %v412
    %v422 = vpack.c.b16 %v414, %v414
    %vm430 = vcmask 982016
    %v432 = vsel %vm430, %v362, 0
    %vm434 = vcmask 1043456
    %v436 = vsel %vm434, %v422, 0
    %438 = vmatprep.subr.bf16.mxu0 0
    %439 = vmatpush1.bf16.msra.mxu0 %v415
    %440 = vmatprep.subr.bf16.mxu0 0
    %441 = vmatpush1.bf16.msra.mxu0 %v416
    %442 = vmatprep.subr.bf16.mxu0 0
    %443 = vmatpush1.bf16.msra.mxu0 %v417
    %444 = vmatprep.subr.bf16.mxu0 0
    %445 = vmatpush1.bf16.msra.mxu0 %v418
    %446 = vmatprep.subr.bf16.mxu0 0
    %447 = vmatpush1.bf16.msra.mxu0 %v419
    %448 = vmatprep.subr.bf16.mxu0 0
    %449 = vmatpush1.bf16.msra.mxu0 %v420
    %450 = vmatprep.subr.bf16.mxu0 0
    %451 = vmatpush1.bf16.msra.mxu0 %v421
    %452 = vmatprep.subr.bf16.mxu0 0
    %453 = vmatpush1.bf16.msra.mxu0 %v436
    %454 = vmatprep.subr.bf16.mxu0 0
    %455 = vmatpush1.bf16.msra.mxu0 0
    %456 = vmatprep.subr.bf16.mxu0 0
    %457 = vmatpush1.bf16.msra.mxu0 0
    %458 = vmatprep.subr.bf16.mxu0 0
    %459 = vmatpush1.bf16.msra.mxu0 0
    %460 = vmatprep.subr.bf16.mxu0 0
    %461 = vmatpush1.bf16.msra.mxu0 0
    %462 = vmatprep.subr.bf16.mxu0 0
    %463 = vmatpush1.bf16.msra.mxu0 0
    %464 = vmatprep.subr.bf16.mxu0 0
    %465 = vmatpush1.bf16.msra.mxu0 0
    %466 = vmatprep.subr.bf16.mxu0 0
    %467 = vmatpush1.bf16.msra.mxu0 0
    %468 = vmatprep.subr.bf16.mxu0 0
    %469 = vmatpush1.bf16.msra.mxu0 0
    %470 = vmatprep.mubr.bf16.mxu0 0
    %471 = vmatmul.mubr.bf16.gmra.mrb[0].mxu0 %v432
    %v472 = vpop.f32.mrb[0].mxu0
    %v473 = vadd.f32 %v383, %v472
    %v474 = vpop.f32.mrb[0].mxu0
    %v475 = vpop.f32.mrb[0].mxu0
    %v476 = vpop.f32.mrb[0].mxu0
    %477 = vdwg.mxu0
    %v478 = vmax.f32 %v473, 0.0
    %v479 = vpack.c.bf16 %v478, %v478
    %v480 = vld [vmem:[%s8] sm:$0xf]
    %v481 = vld [vmem:[%s8 + $0x4] sm:$0xf]
    %v482 = vld [vmem:[%s8 + $0x8] sm:$0xf]
    %v483 = vld [vmem:[%s8 + $0xc] sm:$0xf]
    %v484 = vld [vmem:[%s8 + $0x10] sm:$0xf]
    %v485 = vld [vmem:[%s8 + $0x14] sm:$0xf]
    %v486 = vld [vmem:[%s8 + $0x18] sm:$0xf]
    %v487 = vld [vmem:[%s8 + $0x1c] sm:$0xf]
    %v488 = vld [vmem:[%s8 + $0x20] sm:$0xf]
    %v489 = vld [vmem:[%s8 + $0x24] sm:$0xf]
    %v490 = vld [vmem:[%s8 + $0x28] sm:$0x3]
    %v491 = vld [vmem:[%s9] sm:$0x1]
    %v493 = vlaneseq
    %v494 = vshrl.u32 %v493, 7
    %v495 = vsub.s32 0, %v494
    %v496 = vrot.slane %v491, %v495
    %v509 = vunpack.c.l.b16 %v480
    %v510 = vunpack.c.l.b16 %v481
    %v511 = vunpack.c.l.b16 %v482
    %v512 = vunpack.c.l.b16 %v483
    %v513 = vunpack.c.l.b16 %v484
    %v514 = vunpack.c.l.b16 %v485
    %v515 = vunpack.c.l.b16 %v486
    %v516 = vunpack.c.l.b16 %v487
    %v517 = vunpack.c.l.b16 %v488
    %v518 = vunpack.c.l.b16 %v489
    %v519 = vunpack.c.l.b16 %v490
    %v520 = vpack.c.b16 %v510, %v509
    %v521 = vpack.c.b16 %v512, %v511
    %v522 = vpack.c.b16 %v514, %v513
    %v523 = vpack.c.b16 %v516, %v515
    %v524 = vpack.c.b16 %v518, %v517
    %v525 = vpack.c.b16 %v519, %v519
    %vm531 = vcmask 687104
    %v533 = vsel %vm531, %v479, 0
    %vm535 = vcmask 1041408
    %v537 = vsel %vm535, %v525, 0
    %539 = vmatprep.subr.bf16.mxu0 0
    %540 = vmatpush1.bf16.msra.mxu0 %v520
    %541 = vmatprep.subr.bf16.mxu0 0
    %542 = vmatpush1.bf16.msra.mxu0 %v521
    %543 = vmatprep.subr.bf16.mxu0 0
    %544 = vmatpush1.bf16.msra.mxu0 %v522
    %545 = vmatprep.subr.bf16.mxu0 0
    %546 = vmatpush1.bf16.msra.mxu0 %v523
    %547 = vmatprep.subr.bf16.mxu0 0
    %548 = vmatpush1.bf16.msra.mxu0 %v524
    %549 = vmatprep.subr.bf16.mxu0 0
    %550 = vmatpush1.bf16.msra.mxu0 %v537
    %551 = vmatprep.subr.bf16.mxu0 0
    %552 = vmatpush1.bf16.msra.mxu0 0
    %553 = vmatprep.subr.bf16.mxu0 0
    %554 = vmatpush1.bf16.msra.mxu0 0
    %555 = vmatprep.subr.bf16.mxu0 0
    %556 = vmatpush1.bf16.msra.mxu0 0
    %557 = vmatprep.subr.bf16.mxu0 0
    %558 = vmatpush1.bf16.msra.mxu0 0
    %559 = vmatprep.subr.bf16.mxu0 0
    %560 = vmatpush1.bf16.msra.mxu0 0
    %561 = vmatprep.subr.bf16.mxu0 0
    %562 = vmatpush1.bf16.msra.mxu0 0
    %563 = vmatprep.subr.bf16.mxu0 0
    %564 = vmatpush1.bf16.msra.mxu0 0
    %565 = vmatprep.subr.bf16.mxu0 0
    %566 = vmatpush1.bf16.msra.mxu0 0
    %567 = vmatprep.subr.bf16.mxu0 0
    %568 = vmatpush1.bf16.msra.mxu0 0
    %569 = vmatprep.subr.bf16.mxu0 0
    %570 = vmatpush1.bf16.msra.mxu0 0
    %571 = vmatprep.mubr.bf16.mxu0 0
    %572 = vmatmul.mubr.bf16.gmra.mrb[0].mxu0 %v533
    %v573 = vpop.f32.mrb[0].mxu0
    %v574 = vadd.f32 %v496, %v573
    %v575 = vpop.f32.mrb[0].mxu0
    %v576 = vpop.f32.mrb[0].mxu0
    %v577 = vpop.f32.mrb[0].mxu0
    %578 = vdwg.mxu0
    %vm579 = vcmask 82944
    %580 = vst.msk [vmem:[#allocation2] sm:$0x3] %vm579, %v574
    // Predicated region
    $region42: #{cnn_forward.7} parent=1 // pred_check
      _
    $region43: #{cnn_forward.7} parent=1 // pred_check_branch
      %582 = sbr.rel (0) target = $region45
    $region44: #{cnn_forward.7} parent=1 // pred_region
      %s584 = ssub.s32 32, 32
      %585 = vsyncadd [#allocation3], %s584
      %s587 = sshll.u32 [#allocation2], 4
      %s588 = int_to_ptr.vmem [resolvable:$true] %s587
      %590 = dma.vmem_to_hbm [thread:$0]  %s588, 32, %s10, [#allocation3]
    $region45: #{cnn_forward.7} parent=1 // pred_fallthru
      _
    // Predicated region
    $region46: #{cnn_forward.7} parent=1 // pred_check
      _
    $region47: #{cnn_forward.7} parent=1 // pred_check_branch
      %592 = sbr.rel (0) target = $region49
    $region48: #{cnn_forward.7} parent=1 // pred_region
      %593 = dma.done [#allocation3], 32
    $region49: #{cnn_forward.7} parent=1 // pred_fallthru
      _
    %594 = vsyncpa [#allocation3], 1

</llo_original>
